<compile_context>
chip_gen: v5e
topology: v5e:2x2
jax: 0.10.0
libtpu: 0.0.40
codegen_flags: <defaults>
</compile_context>

<pallas_src>
import math
import functools

import jax
import jax.numpy as jnp
from jax.experimental import pallas as pl
from jax.experimental.pallas import tpu as pltpu


# ----------------------------- config helpers -----------------------------

def _default_vmem_limit():
    # Generation-aware VMEM budget: 3/4 of the chip's VMEM, capped at 100 MiB
    # (v5e/v6e: 128 MiB physical -> ~96 MiB; v7x: 64 MiB -> 48 MiB).
    try:
        cap = int(getattr(pltpu.get_tpu_info(), "vmem_capacity_bytes", 0))
        if cap > 0:
            return int(min(cap * 3 // 4, 100 * 1024 * 1024))
    except Exception:
        pass
    return 64 * 1024 * 1024


VMEM_LIMIT = _default_vmem_limit()


def _row_tile(dim, preferred=512):
    """Row (second-to-last) tile: multiple of 8 that divides dim, or full dim."""
    if dim <= preferred:
        return dim
    t = preferred - (preferred % 8)
    while t >= 8:
        if dim % t == 0:
            return t
        t -= 8
    return dim


def _col_tile(dim, preferred=512):
    """Lane (last) tile: multiple of 128 (MXU-friendly) dividing dim, or full dim."""
    if dim <= preferred:
        return dim
    t = preferred - (preferred % 128)
    while t >= 128:
        if dim % t == 0:
            return t
        t -= 128
    return dim


def _cp(dims):
    return pltpu.CompilerParams(dimension_semantics=dims,
                                vmem_limit_bytes=VMEM_LIMIT)


# ----------------------------- math helpers -----------------------------

def _erf_approx(x):
    # Abramowitz & Stegun 7.1.26 rational approximation, max abs err ~1.5e-7.
    # TODO(synk): uses exp-based rational approx instead of a native erf
    # lowering; accuracy is well below f32 noise for this model.
    p = 0.3275911
    a1, a2, a3, a4, a5 = 0.254829592, -0.284496736, 1.421413741, -1.453152027, 1.061405429
    ax = jnp.abs(x)
    t = 1.0 / (1.0 + p * ax)
    poly = ((((a5 * t + a4) * t + a3) * t + a2) * t + a1) * t
    y = 1.0 - poly * jnp.exp(-ax * ax)
    return jnp.where(x < 0, -y, y)


def _gelu_erf(x):
    # PyTorch F.gelu default (erf-exact form).
    return 0.5 * x * (1.0 + _erf_approx(x * (1.0 / math.sqrt(2.0))))


def _layernorm(y, g, b, eps):
    mean = jnp.mean(y, axis=-1, keepdims=True)
    var = jnp.mean((y - mean) ** 2, axis=-1, keepdims=True)  # biased, like torch LN
    return (y - mean) * jax.lax.rsqrt(var + eps) * g + b


# ----------------------------- Pallas kernels -----------------------------

def _embed_scale_kernel(x_ref, emb_ref, o_ref, *, scale):
    # (x + (var_emb + pos_emb)) * sqrt(d_model); dropout = identity.
    o_ref[...] = (x_ref[...] + emb_ref[...]) * scale


def _attn_block_kernel(xq_ref, xkv_ref, wq_ref, bq_ref, wk_ref, bk_ref,
                       wv_ref, bv_ref, wo_ref, bo_ref, g_ref, bt_ref,
                       o_ref, acc_ref, *, scale, eps):
    # Fused per layer: QKV proj -> per-head attention -> out-proj (accumulated
    # over the head grid axis) -> residual -> LayerNorm.  Output is written
    # token-major / lane-dense as a (1, tq, D) block only on the last head.
    # TODO(synk): for very long S add a KV grid axis with online-softmax
    # (flash style) so the (tq, S) score tile and (S, D) KV block stay bounded
    # on v7x's 64 MiB VMEM.
    h = pl.program_id(2)

    @pl.when(h == 0)
    def _():
        acc_ref[...] = jnp.zeros_like(acc_ref)

    xq = xq_ref[0].astype(jnp.float32)      # (tq, D)  (also the residual rows)
    xkv = xkv_ref[0].astype(jnp.float32)    # (S, D)

    q = jnp.dot(xq, wq_ref[0], preferred_element_type=jnp.float32) + bq_ref[0]   # (tq, Dh)
    k = jnp.dot(xkv, wk_ref[0], preferred_element_type=jnp.float32) + bk_ref[0]  # (S, Dh)
    v = jnp.dot(xkv, wv_ref[0], preferred_element_type=jnp.float32) + bv_ref[0]  # (S, Dh)

    s = jax.lax.dot_general(q, k, (((1,), (1,)), ((), ())),
                            preferred_element_type=jnp.float32) * scale          # (tq, S)
    m = jnp.max(s, axis=-1, keepdims=True)
    p = jnp.exp(s - m)
    p = p / jnp.sum(p, axis=-1, keepdims=True)        # exact divide (torch parity)
    attn = jnp.dot(p, v, preferred_element_type=jnp.float32)                     # (tq, Dh)

    # concat_h(attn_h) @ W_o  ==  sum_h attn_h @ W_o[h*Dh:(h+1)*Dh, :]
    acc_ref[...] += jnp.dot(attn, wo_ref[0], preferred_element_type=jnp.float32) # (tq, D)

    @pl.when(h == pl.num_programs(2) - 1)
    def _():
        y = acc_ref[...] + bo_ref[...] + xq
        o_ref[0] = _layernorm(y, g_ref[...], bt_ref[...], eps).astype(o_ref.dtype)


def _ffn_res_ln_kernel(x_ref, w1_ref, b1_ref, w2_ref, b2_ref, g_ref, bt_ref,
                       o_ref, acc_ref, *, eps):
    # Fused FFN block tiled over Dff chunks:
    #   acc += gelu(x @ W1[:, c] + b1[c]) @ W2[c, :]
    # Residual + LayerNorm finalize on the last chunk.
    c = pl.program_id(1)

    @pl.when(c == 0)
    def _():
        acc_ref[...] = jnp.zeros_like(acc_ref)

    x = x_ref[...].astype(jnp.float32)                                           # (tm, D)
    hidden = jnp.dot(x, w1_ref[...], preferred_element_type=jnp.float32) + b1_ref[...]
    hidden = _gelu_erf(hidden)                                                   # (tm, tff)
    acc_ref[...] += jnp.dot(hidden, w2_ref[...], preferred_element_type=jnp.float32)

    @pl.when(c == pl.num_programs(1) - 1)
    def _():
        y = acc_ref[...] + b2_ref[...] + x
        o_ref[...] = _layernorm(y, g_ref[...], bt_ref[...], eps).astype(o_ref.dtype)


def _decoder_kernel(x_ref, w1_ref, b1_ref, g_ref, bt_ref, w2_ref, b2_ref,
                    o_ref, *, eps, out_dim):
    # Fused LinearDecoder: Linear -> LayerNorm -> ReLU -> (Dropout=id) -> Linear.
    # The lane dimension is padded to a multiple of 128 in the wrapper; the LN
    # statistics are masked to the first `out_dim` lanes so semantics are exact.
    x = x_ref[...].astype(jnp.float32)
    y = jnp.dot(x, w1_ref[...], preferred_element_type=jnp.float32) + b1_ref[...]
    lane = jax.lax.broadcasted_iota(jnp.int32, y.shape, 1)
    mask = (lane < out_dim).astype(jnp.float32)
    y = y * mask
    mean = jnp.sum(y, axis=-1, keepdims=True) / out_dim
    d = (y - mean) * mask
    var = jnp.sum(d * d, axis=-1, keepdims=True) / out_dim
    yln = d * jax.lax.rsqrt(var + eps) * g_ref[...] + bt_ref[...]
    yr = jnp.maximum(yln, 0.0)
    o = jnp.dot(yr, w2_ref[...], preferred_element_type=jnp.float32) + b2_ref[...]
    o_ref[...] = o.astype(o_ref.dtype)


# ----------------------------- Pallas wrappers -----------------------------

def embed_scale(x, emb_add, scale):
    """x: (B, S, D); emb_add: (S, D) shared additive embedding (var + pos)."""
    B, S, D = x.shape
    ts = _row_tile(S, 512)
    return pl.pallas_call(
        functools.partial(_embed_scale_kernel, scale=scale),
        out_shape=jax.ShapeDtypeStruct(x.shape, x.dtype),
        grid=(B, S // ts),
        in_specs=[pl.BlockSpec((1, ts, D), lambda b, s: (b, s, 0)),
                  pl.BlockSpec((ts, D), lambda b, s: (s, 0))],
        out_specs=pl.BlockSpec((1, ts, D), lambda b, s: (b, s, 0)),
        compiler_params=_cp(("parallel", "parallel")),
    )(x, emb_add)


def attention_block(x, wq, bq, wk, bk, wv, bv, wo, bo, gamma, beta,
                    *, scale, eps=1e-5):
    """Fused self-attention block.  x: (B, S, D); weights head-major:
    wq/wk/wv: (H, D, Dh), bq/bk/bv: (H, 1, Dh), wo: (H, Dh, D).
    Returns LayerNorm(x + MHA(x)) as (B, S, D), token-major."""
    B, S, D = x.shape
    H, _, Dh = wq.shape
    tq = _row_tile(S, 512)
    nq = S // tq
    return pl.pallas_call(
        functools.partial(_attn_block_kernel, scale=scale, eps=eps),
        out_shape=jax.ShapeDtypeStruct((B, S, D), x.dtype),
        grid=(B, nq, H),
        in_specs=[
            pl.BlockSpec((1, tq, D), lambda b, qi, hh: (b, qi, 0)),   # q rows / residual
            pl.BlockSpec((1, S, D),  lambda b, qi, hh: (b, 0, 0)),    # kv rows
            pl.BlockSpec((1, D, Dh), lambda b, qi, hh: (hh, 0, 0)),   # wq[h]
            pl.BlockSpec((1, 1, Dh), lambda b, qi, hh: (hh, 0, 0)),   # bq[h]
            pl.BlockSpec((1, D, Dh), lambda b, qi, hh: (hh, 0, 0)),   # wk[h]
            pl.BlockSpec((1, 1, Dh), lambda b, qi, hh: (hh, 0, 0)),   # bk[h]
            pl.BlockSpec((1, D, Dh), lambda b, qi, hh: (hh, 0, 0)),   # wv[h]
            pl.BlockSpec((1, 1, Dh), lambda b, qi, hh: (hh, 0, 0)),   # bv[h]
            pl.BlockSpec((1, Dh, D), lambda b, qi, hh: (hh, 0, 0)),   # wo[h]
            pl.BlockSpec((1, D),     lambda b, qi, hh: (0, 0)),       # bo
            pl.BlockSpec((1, D),     lambda b, qi, hh: (0, 0)),       # ln gamma
            pl.BlockSpec((1, D),     lambda b, qi, hh: (0, 0)),       # ln beta
        ],
        out_specs=pl.BlockSpec((1, tq, D), lambda b, qi, hh: (b, qi, 0)),
        scratch_shapes=[pltpu.VMEM((tq, D), jnp.float32)],
        compiler_params=_cp(("parallel", "parallel", "arbitrary")),
        cost_estimate=pl.CostEstimate(
            flops=int(B * H * (6 * S * D * Dh + 4 * S * S * Dh + 2 * S * Dh * D)),
            transcendentals=int(B * H * S * S),
            bytes_accessed=int(4 * (2 * B * S * D + 4 * D * D + 3 * D))),
    )(x, x, wq, bq, wk, bk, wv, bv, wo, bo.reshape(1, D),
      gamma.reshape(1, D), beta.reshape(1, D))


def ffn_res_ln(x2d, w1, b1, w2, b2, gamma, beta, eps=1e-5):
    """Fused FF1(gelu) + FF2 + residual + LayerNorm, chunked over Dff."""
    M, D = x2d.shape
    Dff = w1.shape[1]
    tm = _row_tile(M, 512)
    tff = _col_tile(Dff, 512)
    return pl.pallas_call(
        functools.partial(_ffn_res_ln_kernel, eps=eps),
        out_shape=jax.ShapeDtypeStruct((M, D), x2d.dtype),
        grid=(M // tm, Dff // tff),
        in_specs=[pl.BlockSpec((tm, D), lambda i, c: (i, 0)),
                  pl.BlockSpec((D, tff), lambda i, c: (0, c)),
                  pl.BlockSpec((1, tff), lambda i, c: (0, c)),
                  pl.BlockSpec((tff, D), lambda i, c: (c, 0)),
                  pl.BlockSpec((1, D), lambda i, c: (0, 0)),
                  pl.BlockSpec((1, D), lambda i, c: (0, 0)),
                  pl.BlockSpec((1, D), lambda i, c: (0, 0))],
        out_specs=pl.BlockSpec((tm, D), lambda i, c: (i, 0)),
        scratch_shapes=[pltpu.VMEM((tm, D), jnp.float32)],
        compiler_params=_cp(("parallel", "arbitrary")),
        cost_estimate=pl.CostEstimate(
            flops=int(4 * M * D * Dff + 10 * M * D),
            transcendentals=int(M * Dff + M),
            bytes_accessed=int(4 * (2 * M * D + 2 * D * Dff + Dff + 3 * D))),
    )(x2d, w1, b1.reshape(1, Dff), w2, b2.reshape(1, D),
      gamma.reshape(1, D), beta.reshape(1, D))


def linear_decoder(x2d, w1, b1, gamma, beta, w2, b2, eps=1e-5):
    """Fused Linear -> LayerNorm -> ReLU -> Linear, with out_dim padded to a
    lane-dense multiple of 128 (exact masked LN); slices back to out_dim."""
    M, D = x2d.shape
    O = w1.shape[1]
    Op = max(128, ((O + 127) // 128) * 128)
    pad = Op - O
    w1p = jnp.pad(w1, ((0, 0), (0, pad)))
    b1p = jnp.pad(b1, (0, pad))
    gp = jnp.pad(gamma, (0, pad), constant_values=1.0)
    btp = jnp.pad(beta, (0, pad))
    w2p = jnp.pad(w2, ((0, pad), (0, pad)))
    b2p = jnp.pad(b2, (0, pad))
    tm = _row_tile(M, 512)
    out = pl.pallas_call(
        functools.partial(_decoder_kernel, eps=eps, out_dim=O),
        out_shape=jax.ShapeDtypeStruct((M, Op), x2d.dtype),
        grid=(M // tm,),
        in_specs=[pl.BlockSpec((tm, D), lambda i: (i, 0)),
                  pl.BlockSpec((D, Op), lambda i: (0, 0)),
                  pl.BlockSpec((1, Op), lambda i: (0, 0)),
                  pl.BlockSpec((1, Op), lambda i: (0, 0)),
                  pl.BlockSpec((1, Op), lambda i: (0, 0)),
                  pl.BlockSpec((Op, Op), lambda i: (0, 0)),
                  pl.BlockSpec((1, Op), lambda i: (0, 0))],
        out_specs=pl.BlockSpec((tm, Op), lambda i: (i, 0)),
        compiler_params=_cp(("parallel",)),
        cost_estimate=pl.CostEstimate(
            flops=int(2 * M * D * Op + 2 * M * Op * Op + 10 * M * Op),
            transcendentals=int(M),
            bytes_accessed=int(4 * (M * D + D * Op + Op * Op + M * Op))),
    )(x2d, w1p, b1p.reshape(1, Op), gp.reshape(1, Op), btp.reshape(1, Op),
      w2p, b2p.reshape(1, Op))
    return out[:, :O]


# ----------------------------- parameters -----------------------------

def init_params(key, in_dim, out_dim, n_layers, max_var_len, dtype=jnp.float32):
    k = key

    def nk():
        nonlocal k
        k, sub = jax.random.split(k)
        return sub

    def w_init(shape):
        return (jax.random.normal(nk(), shape, jnp.float32) * 0.02).astype(dtype)

    z = lambda s: jnp.zeros(s, dtype)
    o = lambda s: jnp.ones(s, dtype)

    p = {"emb_table": w_init((max_var_len, in_dim)), "layers": []}
    for _ in range(n_layers):
        p["layers"].append({
            "w_qkv": w_init((in_dim, 3 * in_dim)), "b_qkv": z((3 * in_dim,)),
            "w_o": w_init((in_dim, in_dim)),       "b_o": z((in_dim,)),
            "ln1_g": o((in_dim,)), "ln1_b": z((in_dim,)),
            "w_ff1": w_init((in_dim, 4 * in_dim)), "b_ff1": z((4 * in_dim,)),
            "w_ff2": w_init((4 * in_dim, in_dim)), "b_ff2": z((in_dim,)),
            "ln2_g": o((in_dim,)), "ln2_b": z((in_dim,)),
        })
    p["dec_w1"] = w_init((in_dim, out_dim));  p["dec_b1"] = z((out_dim,))
    p["dec_ln_g"] = o((out_dim,));            p["dec_ln_b"] = z((out_dim,))
    p["dec_w2"] = w_init((out_dim, out_dim)); p["dec_b2"] = z((out_dim,))
    return p


# ----------------------------- forward pass -----------------------------

def clibert_forward(params, x, var_list, *, num_heads):
    B, T, V, D = x.shape
    S = T * V
    H = num_heads
    assert D % H == 0
    Dh = D // H

    # positional_encoding (matches CliBERT.positional_encoding) -- tiny glue
    position = jnp.arange(T, dtype=jnp.float32)[:, None]
    div_term = jnp.exp(jnp.arange(0, D, 2, dtype=jnp.float32) * (-math.log(10000.0) / D))
    pe = jnp.zeros((T, D), jnp.float32)
    pe = pe.at[:, 0::2].set(jnp.sin(position * div_term))
    pe = pe.at[:, 1::2].set(jnp.cos(position * div_term))
    pos_emb = jnp.repeat(pe, V, axis=0).astype(x.dtype)          # (S, D), time-major

    # src_id is None branch: var_list.repeat_interleave(time_len) -- replicated
    # literally from the spec (var-major var_seq, identical for every batch).
    var_seq = jnp.repeat(var_list, T)                            # (S,)
    var_emb = params["emb_table"][var_seq]                       # (S, D) gather (glue)
    emb_add = (var_emb + pos_emb).astype(x.dtype)

    x_flat = x.reshape(B, S, D)
    h = embed_scale(x_flat, emb_add, math.sqrt(D))               # (B, S, D)

    scale = 1.0 / math.sqrt(Dh)
    for lyr in params["layers"]:
        # Head-major weight views (cheap reshapes/transposes on D*D params).
        wq = lyr["w_qkv"][:, :D].reshape(D, H, Dh).transpose(1, 0, 2)        # (H, D, Dh)
        wk = lyr["w_qkv"][:, D:2 * D].reshape(D, H, Dh).transpose(1, 0, 2)
        wv = lyr["w_qkv"][:, 2 * D:].reshape(D, H, Dh).transpose(1, 0, 2)
        bq = lyr["b_qkv"][:D].reshape(H, 1, Dh)
        bk = lyr["b_qkv"][D:2 * D].reshape(H, 1, Dh)
        bv = lyr["b_qkv"][2 * D:].reshape(H, 1, Dh)
        wo = lyr["w_o"].reshape(H, Dh, D)                                    # (H, Dh, D)

        # ---- fused self-attention block (post-LN, like nn.TransformerEncoderLayer) ----
        h = attention_block(h, wq, bq, wk, bk, wv, bv, wo, lyr["b_o"],
                            lyr["ln1_g"], lyr["ln1_b"], scale=scale)         # (B, S, D)

        # ---- fused feed-forward block (FF1 + gelu + FF2 + residual + LN) ----
        h2d = ffn_res_ln(h.reshape(B * S, D), lyr["w_ff1"], lyr["b_ff1"],
                         lyr["w_ff2"], lyr["b_ff2"], lyr["ln2_g"], lyr["ln2_b"])
        h = h2d.reshape(B, S, D)

    # ---- LinearDecoder: Linear -> LayerNorm -> ReLU -> Dropout(id) -> Linear ----
    out = linear_decoder(h.reshape(B * S, D), params["dec_w1"], params["dec_b1"],
                         params["dec_ln_g"], params["dec_ln_b"],
                         params["dec_w2"], params["dec_b2"])
    return out.reshape(B, S, -1)


# ----------------------------- main -----------------------------

if __name__ == "__main__":
    key = jax.random.PRNGKey(0)
    B, T, V, D = 2, 3, 4, 32          # batch, time_len, var_len, d_model (= in_dim)
    num_heads = 4                      # head_dim = 8
    n_layers = 2
    out_dim = 16
    max_var_len = 300

    kx, kv, kp = jax.random.split(key, 3)
    x = jax.random.normal(kx, (B, T, V, D), jnp.float32)
    var_list = jax.random.randint(kv, (V,), 0, max_var_len, jnp.int32)
    params = init_params(kp, D, out_dim, n_layers, max_var_len)

    fwd = jax.jit(functools.partial(clibert_forward, num_heads=num_heads))
    out = jax.block_until_ready(fwd(params, x, var_list))
    assert out.shape == (B, T * V, out_dim), out.shape
    assert bool(jnp.all(jnp.isfinite(out)))
    print("KERNEL_OK")
</pallas_src>

<mosaic_0001>
module attributes {stable_mosaic.version = 11 : i64} {
  func.func @_embed_scale_kernel(%arg0: i32, %arg1: i32, %arg2: memref<1x12x32xf32, #tpu.memory_space<vmem>>, %arg3: memref<12x32xf32, #tpu.memory_space<vmem>>, %arg4: memref<1x12x32xf32, #tpu.memory_space<vmem>>) attributes {dimension_semantics = [#tpu.dimension_semantics<parallel>, #tpu.dimension_semantics<parallel>], iteration_bounds = array<i64: 2, 1>, scalar_prefetch = 0 : i64, scratch_operands = 0 : i64, tpu.core_type = #tpu.core_type<tc>, window_params = [{transform_indices = @transform_0, window_bounds = array<i64: 1, 12, 32>}, {transform_indices = @transform_1, window_bounds = array<i64: 12, 32>}, {transform_indices = @transform_2, window_bounds = array<i64: 1, 12, 32>}]} {
    %c0 = arith.constant 0 : index
    %c0_0 = arith.constant 0 : index
    %c0_1 = arith.constant 0 : index
    %0 = vector.load %arg2[%c0, %c0_0, %c0_1] : memref<1x12x32xf32, #tpu.memory_space<vmem>>, vector<1x12x32xf32>
    %c0_2 = arith.constant 0 : index
    %c0_3 = arith.constant 0 : index
    %1 = vector.load %arg3[%c0_2, %c0_3] : memref<12x32xf32, #tpu.memory_space<vmem>>, vector<12x32xf32>
    %2 = vector.shape_cast %1 : vector<12x32xf32> to vector<1x12x32xf32>
    %3 = arith.addf %0, %2 : vector<1x12x32xf32>
    %cst = arith.constant 5.65685415 : f32
    %4 = vector.broadcast %cst : f32 to vector<1x12x32xf32>
    %5 = arith.mulf %3, %4 : vector<1x12x32xf32>
    %c0_4 = arith.constant 0 : index
    %c0_5 = arith.constant 0 : index
    %c0_6 = arith.constant 0 : index
    %6 = vector.load %arg4[%c0_4, %c0_5, %c0_6] : memref<1x12x32xf32, #tpu.memory_space<vmem>>, vector<1x12x32xf32>
    tpu.vector_store %arg4[%c0_4, %c0_5, %c0_6], %5 {strides = array<i32>} : memref<1x12x32xf32, #tpu.memory_space<vmem>>, vector<1x12x32xf32>,
    return
  }
  func.func @transform_0(%arg0: i32, %arg1: i32) -> (i32, i32, i32) {
    %c0_i32 = arith.constant 0 : i32
    %c0_i32_0 = arith.constant 0 : i32
    return %arg0, %arg1, %c0_i32 : i32, i32, i32
  }
  func.func @transform_1(%arg0: i32, %arg1: i32) -> (i32, i32) {
    %c0_i32 = arith.constant 0 : i32
    %c0_i32_0 = arith.constant 0 : i32
    return %arg1, %c0_i32 : i32, i32
  }
  func.func @transform_2(%arg0: i32, %arg1: i32) -> (i32, i32, i32) {
    %c0_i32 = arith.constant 0 : i32
    %c0_i32_0 = arith.constant 0 : i32
    return %arg0, %arg1, %c0_i32 : i32, i32, i32
  }
}

module attributes {stable_mosaic.version = 11 : i64} {
  func.func @_attn_block_kernel(%arg0: i32, %arg1: i32, %arg2: i32, %arg3: memref<1x12x32xf32, #tpu.memory_space<vmem>>, %arg4: memref<1x12x32xf32, #tpu.memory_space<vmem>>, %arg5: memref<1x32x8xf32, #tpu.memory_space<vmem>>, %arg6: memref<1x1x8xf32, #tpu.memory_space<vmem>>, %arg7: memref<1x32x8xf32, #tpu.memory_space<vmem>>, %arg8: memref<1x1x8xf32, #tpu.memory_space<vmem>>, %arg9: memref<1x32x8xf32, #tpu.memory_space<vmem>>, %arg10: memref<1x1x8xf32, #tpu.memory_space<vmem>>, %arg11: memref<1x8x32xf32, #tpu.memory_space<vmem>>, %arg12: memref<1x32xf32, #tpu.memory_space<vmem>>, %arg13: memref<1x32xf32, #tpu.memory_space<vmem>>, %arg14: memref<1x32xf32, #tpu.memory_space<vmem>>, %arg15: memref<1x12x32xf32, #tpu.memory_space<vmem>>, %arg16: memref<12x32xf32, #tpu.memory_space<vmem>>) attributes {dimension_semantics = [#tpu.dimension_semantics<parallel>, #tpu.dimension_semantics<parallel>, #tpu.dimension_semantics<arbitrary>], iteration_bounds = array<i64: 2, 1, 4>, scalar_prefetch = 0 : i64, scratch_operands = 1 : i64, tpu.core_type = #tpu.core_type<tc>, window_params = [{transform_indices = @transform_0, window_bounds = array<i64: 1, 12, 32>}, {transform_indices = @transform_1, window_bounds = array<i64: 1, 12, 32>}, {transform_indices = @transform_2, window_bounds = array<i64: 1, 32, 8>}, {transform_indices = @transform_3, window_bounds = array<i64: 1, 1, 8>}, {transform_indices = @transform_4, window_bounds = array<i64: 1, 32, 8>}, {transform_indices = @transform_5, window_bounds = array<i64: 1, 1, 8>}, {transform_indices = @transform_6, window_bounds = array<i64: 1, 32, 8>}, {transform_indices = @transform_7, window_bounds = array<i64: 1, 1, 8>}, {transform_indices = @transform_8, window_bounds = array<i64: 1, 8, 32>}, {pipeline_mode = #tpu.pipeline_mode<synchronous>, transform_indices = @transform_9, window_bounds = array<i64: 1, 32>}, {pipeline_mode = #tpu.pipeline_mode<synchronous>, transform_indices = @transform_10, window_bounds = array<i64: 1, 32>}, {pipeline_mode = #tpu.pipeline_mode<synchronous>, transform_indices = @transform_11, window_bounds = array<i64: 1, 32>}, {transform_indices = @transform_12, window_bounds = array<i64: 1, 12, 32>}]} {
    %c0_i32 = arith.constant 0 : i32
    %0 = arith.cmpi eq, %arg2, %c0_i32 : i32
    %1 = arith.extui %0 : i1 to i32
    %c0_i32_0 = arith.constant 0 : i32
    %2 = arith.cmpi ne, %1, %c0_i32_0 : i32
    scf.if %2 {
      %cst_40 = arith.constant 0.000000e+00 : f32
      %50 = vector.broadcast %cst_40 : f32 to vector<12x32xf32>
      %c0_41 = arith.constant 0 : index
      %c0_42 = arith.constant 0 : index
      %51 = vector.load %arg16[%c0_41, %c0_42] : memref<12x32xf32, #tpu.memory_space<vmem>>, vector<12x32xf32>
      tpu.vector_store %arg16[%c0_41, %c0_42], %50 {strides = array<i32>} : memref<12x32xf32, #tpu.memory_space<vmem>>, vector<12x32xf32>,
    } else {
    }
    %c0 = arith.constant 0 : index
    %c0_1 = arith.constant 0 : index
    %c0_2 = arith.constant 0 : index
    %3 = vector.load %arg3[%c0, %c0_1, %c0_2] : memref<1x12x32xf32, #tpu.memory_space<vmem>>, vector<1x12x32xf32>
    %4 = vector.shape_cast %3 : vector<1x12x32xf32> to vector<12x32xf32>
    %c0_3 = arith.constant 0 : index
    %c0_4 = arith.constant 0 : index
    %c0_5 = arith.constant 0 : index
    %5 = vector.load %arg4[%c0_3, %c0_4, %c0_5] : memref<1x12x32xf32, #tpu.memory_space<vmem>>, vector<1x12x32xf32>
    %6 = vector.shape_cast %5 : vector<1x12x32xf32> to vector<12x32xf32>
    %c0_6 = arith.constant 0 : index
    %c0_7 = arith.constant 0 : index
    %c0_8 = arith.constant 0 : index
    %7 = vector.load %arg5[%c0_6, %c0_7, %c0_8] : memref<1x32x8xf32, #tpu.memory_space<vmem>>, vector<1x32x8xf32>
    %8 = vector.shape_cast %7 : vector<1x32x8xf32> to vector<32x8xf32>
    %cst = arith.constant dense<0.000000e+00> : vector<12x8xf32>
    %9 = tpu.matmul %4, %8, %cst {dimension_numbers = #tpu.dot_dimension_numbers<[1], [0], [0], [1], [0, 0, 1, 1], [], []>} : vector<12x32xf32>, vector<32x8xf32>, vector<12x8xf32> -> vector<12x8xf32>
    %c0_9 = arith.constant 0 : index
    %c0_10 = arith.constant 0 : index
    %c0_11 = arith.constant 0 : index
    %10 = vector.load %arg6[%c0_9, %c0_10, %c0_11] : memref<1x1x8xf32, #tpu.memory_space<vmem>>, vector<1x1x8xf32>
    %11 = vector.shape_cast %10 : vector<1x1x8xf32> to vector<1x8xf32>
    %12 = vector.broadcast %11 : vector<1x8xf32> to vector<12x8xf32>
    %13 = arith.addf %9, %12 : vector<12x8xf32>
    %c0_12 = arith.constant 0 : index
    %c0_13 = arith.constant 0 : index
    %c0_14 = arith.constant 0 : index
    %14 = vector.load %arg7[%c0_12, %c0_13, %c0_14] : memref<1x32x8xf32, #tpu.memory_space<vmem>>, vector<1x32x8xf32>
    %15 = vector.shape_cast %14 : vector<1x32x8xf32> to vector<32x8xf32>
    %cst_15 = arith.constant dense<0.000000e+00> : vector<12x8xf32>
    %16 = tpu.matmul %6, %15, %cst_15 {dimension_numbers = #tpu.dot_dimension_numbers<[1], [0], [0], [1], [0, 0, 1, 1], [], []>} : vector<12x32xf32>, vector<32x8xf32>, vector<12x8xf32> -> vector<12x8xf32>
    %c0_16 = arith.constant 0 : index
    %c0_17 = arith.constant 0 : index
    %c0_18 = arith.constant 0 : index
    %17 = vector.load %arg8[%c0_16, %c0_17, %c0_18] : memref<1x1x8xf32, #tpu.memory_space<vmem>>, vector<1x1x8xf32>
    %18 = vector.shape_cast %17 : vector<1x1x8xf32> to vector<1x8xf32>
    %19 = vector.broadcast %18 : vector<1x8xf32> to vector<12x8xf32>
    %20 = arith.addf %16, %19 : vector<12x8xf32>
    %c0_19 = arith.constant 0 : index
    %c0_20 = arith.constant 0 : index
    %c0_21 = arith.constant 0 : index
    %21 = vector.load %arg9[%c0_19, %c0_20, %c0_21] : memref<1x32x8xf32, #tpu.memory_space<vmem>>, vector<1x32x8xf32>
    %22 = vector.shape_cast %21 : vector<1x32x8xf32> to vector<32x8xf32>
    %cst_22 = arith.constant dense<0.000000e+00> : vector<12x8xf32>
    %23 = tpu.matmul %6, %22, %cst_22 {dimension_numbers = #tpu.dot_dimension_numbers<[1], [0], [0], [1], [0, 0, 1, 1], [], []>} : vector<12x32xf32>, vector<32x8xf32>, vector<12x8xf32> -> vector<12x8xf32>
    %c0_23 = arith.constant 0 : index
    %c0_24 = arith.constant 0 : index
    %c0_25 = arith.constant 0 : index
    %24 = vector.load %arg10[%c0_23, %c0_24, %c0_25] : memref<1x1x8xf32, #tpu.memory_space<vmem>>, vector<1x1x8xf32>
    %25 = vector.shape_cast %24 : vector<1x1x8xf32> to vector<1x8xf32>
    %26 = vector.broadcast %25 : vector<1x8xf32> to vector<12x8xf32>
    %27 = arith.addf %23, %26 : vector<12x8xf32>
    %cst_26 = arith.constant dense<0.000000e+00> : vector<12x12xf32>
    %28 = tpu.matmul %13, %20, %cst_26 {dimension_numbers = #tpu.dot_dimension_numbers<[1], [1], [0], [0], [0, 0, 1, 0], [], []>} : vector<12x8xf32>, vector<12x8xf32>, vector<12x12xf32> -> vector<12x12xf32>
    %cst_27 = arith.constant 0.353553385 : f32
    %29 = vector.broadcast %cst_27 : f32 to vector<12x12xf32>
    %30 = arith.mulf %28, %29 : vector<12x12xf32>
    %cst_28 = arith.constant dense<0xFF800000> : vector<12xf32>
    %31 = vector.multi_reduction <maximumf>, %30, %cst_28 [1] : vector<12x12xf32> to vector<12xf32>
    %32 = vector.shape_cast %31 : vector<12xf32> to vector<12x1xf32>
    %33 = vector.broadcast %32 : vector<12x1xf32> to vector<12x12xf32>
    %34 = arith.subf %30, %33 : vector<12x12xf32>
    %35 = math.exp %34 : vector<12x12xf32>
    %cst_29 = arith.constant dense<0.000000e+00> : vector<12xf32>
    %36 = vector.multi_reduction <add>, %35, %cst_29 [1] : vector<12x12xf32> to vector<12xf32>
    %37 = vector.shape_cast %36 : vector<12xf32> to vector<12x1xf32>
    %38 = vector.broadcast %37 : vector<12x1xf32> to vector<12x12xf32>
    %39 = arith.divf %35, %38 : vector<12x12xf32>
    %cst_30 = arith.constant dense<0.000000e+00> : vector<12x8xf32>
    %40 = tpu.matmul %39, %27, %cst_30 {dimension_numbers = #tpu.dot_dimension_numbers<[1], [0], [0], [1], [0, 0, 1, 1], [], []>} : vector<12x12xf32>, vector<12x8xf32>, vector<12x8xf32> -> vector<12x8xf32>
    %c0_31 = arith.constant 0 : index
    %c0_32 = arith.constant 0 : index
    %41 = vector.load %arg16[%c0_31, %c0_32] : memref<12x32xf32, #tpu.memory_space<vmem>>, vector<12x32xf32>
    %c0_33 = arith.constant 0 : index
    %c0_34 = arith.constant 0 : index
    %c0_35 = arith.constant 0 : index
    %42 = vector.load %arg11[%c0_33, %c0_34, %c0_35] : memref<1x8x32xf32, #tpu.memory_space<vmem>>, vector<1x8x32xf32>
    %43 = vector.shape_cast %42 : vector<1x8x32xf32> to vector<8x32xf32>
    %cst_36 = arith.constant dense<0.000000e+00> : vector<12x32xf32>
    %44 = tpu.matmul %40, %43, %cst_36 {dimension_numbers = #tpu.dot_dimension_numbers<[1], [0], [0], [1], [0, 0, 1, 1], [], []>} : vector<12x8xf32>, vector<8x32xf32>, vector<12x32xf32> -> vector<12x32xf32>
    %45 = arith.addf %41, %44 : vector<12x32xf32>
    %c0_37 = arith.constant 0 : index
    %c0_38 = arith.constant 0 : index
    %46 = vector.load %arg16[%c0_37, %c0_38] : memref<12x32xf32, #tpu.memory_space<vmem>>, vector<12x32xf32>
    tpu.vector_store %arg16[%c0_37, %c0_38], %45 {strides = array<i32>} : memref<12x32xf32, #tpu.memory_space<vmem>>, vector<12x32xf32>,
    %c3_i32 = arith.constant 3 : i32
    %47 = arith.cmpi eq, %arg2, %c3_i32 : i32
    %48 = arith.extui %47 : i1 to i32
    %c0_i32_39 = arith.constant 0 : i32
    %49 = arith.cmpi ne, %48, %c0_i32_39 : i32
    scf.if %49 {
      %c0_40 = arith.constant 0 : index
      %c0_41 = arith.constant 0 : index
      %50 = vector.load %arg16[%c0_40, %c0_41] : memref<12x32xf32, #tpu.memory_space<vmem>>, vector<12x32xf32>
      %c0_42 = arith.constant 0 : index
      %c0_43 = arith.constant 0 : index
      %51 = vector.load %arg12[%c0_42, %c0_43] : memref<1x32xf32, #tpu.memory_space<vmem>>, vector<1x32xf32>
      %52 = vector.broadcast %51 : vector<1x32xf32> to vector<12x32xf32>
      %53 = arith.addf %50, %52 : vector<12x32xf32>
      %54 = arith.addf %53, %4 : vector<12x32xf32>
      %c0_44 = arith.constant 0 : index
      %c0_45 = arith.constant 0 : index
      %55 = vector.load %arg13[%c0_44, %c0_45] : memref<1x32xf32, #tpu.memory_space<vmem>>, vector<1x32xf32>
      %c0_46 = arith.constant 0 : index
      %c0_47 = arith.constant 0 : index
      %56 = vector.load %arg14[%c0_46, %c0_47] : memref<1x32xf32, #tpu.memory_space<vmem>>, vector<1x32xf32>
      %cst_48 = arith.constant dense<0.000000e+00> : vector<12xf32>
      %57 = vector.multi_reduction <add>, %54, %cst_48 [1] : vector<12x32xf32> to vector<12xf32>
      %58 = vector.shape_cast %57 : vector<12xf32> to vector<12x1xf32>
      %cst_49 = arith.constant 3.200000e+01 : f32
      %59 = vector.broadcast %cst_49 : f32 to vector<12x1xf32>
      %60 = arith.divf %58, %59 : vector<12x1xf32>
      %61 = vector.broadcast %60 : vector<12x1xf32> to vector<12x32xf32>
      %62 = arith.subf %54, %61 : vector<12x32xf32>
      %63 = arith.mulf %62, %62 : vector<12x32xf32>
      %cst_50 = arith.constant dense<0.000000e+00> : vector<12xf32>
      %64 = vector.multi_reduction <add>, %63, %cst_50 [1] : vector<12x32xf32> to vector<12xf32>
      %65 = vector.shape_cast %64 : vector<12xf32> to vector<12x1xf32>
      %cst_51 = arith.constant 3.200000e+01 : f32
      %66 = vector.broadcast %cst_51 : f32 to vector<12x1xf32>
      %67 = arith.divf %65, %66 : vector<12x1xf32>
      %68 = vector.broadcast %60 : vector<12x1xf32> to vector<12x32xf32>
      %69 = arith.subf %54, %68 : vector<12x32xf32>
      %cst_52 = arith.constant 9.99999974E-6 : f32
      %70 = vector.broadcast %cst_52 : f32 to vector<12x1xf32>
      %71 = arith.addf %67, %70 : vector<12x1xf32>
      %72 = math.rsqrt %71 : vector<12x1xf32>
      %73 = vector.broadcast %72 : vector<12x1xf32> to vector<12x32xf32>
      %74 = arith.mulf %69, %73 : vector<12x32xf32>
      %75 = vector.broadcast %55 : vector<1x32xf32> to vector<12x32xf32>
      %76 = arith.mulf %74, %75 : vector<12x32xf32>
      %77 = vector.broadcast %56 : vector<1x32xf32> to vector<12x32xf32>
      %78 = arith.addf %76, %77 : vector<12x32xf32>
      %c0_53 = arith.constant 0 : index
      %c0_54 = arith.constant 0 : index
      %c0_55 = arith.constant 0 : index
      %79 = vector.load %arg15[%c0_53, %c0_54, %c0_55] : memref<1x12x32xf32, #tpu.memory_space<vmem>>, vector<1x12x32xf32>
      %80 = vector.shape_cast %79 : vector<1x12x32xf32> to vector<12x32xf32>
      %81 = vector.shape_cast %78 : vector<12x32xf32> to vector<1x12x32xf32>
      tpu.vector_store %arg15[%c0_53, %c0_54, %c0_55], %81 {strides = array<i32>} : memref<1x12x32xf32, #tpu.memory_space<vmem>>, vector<1x12x32xf32>,
    } else {
    }
    return
  }
  func.func @transform_0(%arg0: i32, %arg1: i32, %arg2: i32) -> (i32, i32, i32) {
    %c0_i32 = arith.constant 0 : i32
    %c0_i32_0 = arith.constant 0 : i32
    return %arg0, %arg1, %c0_i32 : i32, i32, i32
  }
  func.func @transform_1(%arg0: i32, %arg1: i32, %arg2: i32) -> (i32, i32, i32) {
    %c0_i32 = arith.constant 0 : i32
    %c0_i32_0 = arith.constant 0 : i32
    %c0_i32_1 = arith.constant 0 : i32
    return %arg0, %c0_i32, %c0_i32_0 : i32, i32, i32
  }
  func.func @transform_2(%arg0: i32, %arg1: i32, %arg2: i32) -> (i32, i32, i32) {
    %c0_i32 = arith.constant 0 : i32
    %c0_i32_0 = arith.constant 0 : i32
    %c0_i32_1 = arith.constant 0 : i32
    return %arg2, %c0_i32, %c0_i32_0 : i32, i32, i32
  }
  func.func @transform_3(%arg0: i32, %arg1: i32, %arg2: i32) -> (i32, i32, i32) {
    %c0_i32 = arith.constant 0 : i32
    %c0_i32_0 = arith.constant 0 : i32
    %c0_i32_1 = arith.constant 0 : i32
    return %arg2, %c0_i32, %c0_i32_0 : i32, i32, i32
  }
  func.func @transform_4(%arg0: i32, %arg1: i32, %arg2: i32) -> (i32, i32, i32) {
    %c0_i32 = arith.constant 0 : i32
    %c0_i32_0 = arith.constant 0 : i32
    %c0_i32_1 = arith.constant 0 : i32
    return %arg2, %c0_i32, %c0_i32_0 : i32, i32, i32
  }
  func.func @transform_5(%arg0: i32, %arg1: i32, %arg2: i32) -> (i32, i32, i32) {
    %c0_i32 = arith.constant 0 : i32
    %c0_i32_0 = arith.constant 0 : i32
    %c0_i32_1 = arith.constant 0 : i32
    return %arg2, %c0_i32, %c0_i32_0 : i32, i32, i32
  }
  func.func @transform_6(%arg0: i32, %arg1: i32, %arg2: i32) -> (i32, i32, i32) {
    %c0_i32 = arith.constant 0 : i32
    %c0_i32_0 = arith.constant 0 : i32
    %c0_i32_1 = arith.constant 0 : i32
    return %arg2, %c0_i32, %c0_i32_0 : i32, i32, i32
  }
  func.func @transform_7(%arg0: i32, %arg1: i32, %arg2: i32) -> (i32, i32, i32) {
    %c0_i32 = arith.constant 0 : i32
    %c0_i32_0 = arith.constant 0 : i32
    %c0_i32_1 = arith.constant 0 : i32
    return %arg2, %c0_i32, %c0_i32_0 : i32, i32, i32
  }
  func.func @transform_8(%arg0: i32, %arg1: i32, %arg2: i32) -> (i32, i32, i32) {
    %c0_i32 = arith.constant 0 : i32
    %c0_i32_0 = arith.constant 0 : i32
    %c0_i32_1 = arith.constant 0 : i32
    return %arg2, %c0_i32, %c0_i32_0 : i32, i32, i32
  }
  func.func @transform_9(%arg0: i32, %arg1: i32, %arg2: i32) -> (i32, i32) {
    %c0_i32 = arith.constant 0 : i32
    %c0_i32_0 = arith.constant 0 : i32
    %c0_i32_1 = arith.constant 0 : i32
    return %c0_i32, %c0_i32_0 : i32, i32
  }
  func.func @transform_10(%arg0: i32, %arg1: i32, %arg2: i32) -> (i32, i32) {
    %c0_i32 = arith.constant 0 : i32
    %c0_i32_0 = arith.constant 0 : i32
    %c0_i32_1 = arith.constant 0 : i32
    return %c0_i32, %c0_i32_0 : i32, i32
  }
  func.func @transform_11(%arg0: i32, %arg1: i32, %arg2: i32) -> (i32, i32) {
    %c0_i32 = arith.constant 0 : i32
    %c0_i32_0 = arith.constant 0 : i32
    %c0_i32_1 = arith.constant 0 : i32
    return %c0_i32, %c0_i32_0 : i32, i32
  }
  func.func @transform_12(%arg0: i32, %arg1: i32, %arg2: i32) -> (i32, i32, i32) {
    %c0_i32 = arith.constant 0 : i32
    %c0_i32_0 = arith.constant 0 : i32
    return %arg0, %arg1, %c0_i32 : i32, i32, i32
  }
}

module attributes {stable_mosaic.version = 11 : i64} {
  func.func @_ffn_res_ln_kernel(%arg0: i32, %arg1: i32, %arg2: memref<24x32xf32, #tpu.memory_space<vmem>>, %arg3: memref<32x128xf32, #tpu.memory_space<vmem>>, %arg4: memref<1x128xf32, #tpu.memory_space<vmem>>, %arg5: memref<128x32xf32, #tpu.memory_space<vmem>>, %arg6: memref<1x32xf32, #tpu.memory_space<vmem>>, %arg7: memref<1x32xf32, #tpu.memory_space<vmem>>, %arg8: memref<1x32xf32, #tpu.memory_space<vmem>>, %arg9: memref<24x32xf32, #tpu.memory_space<vmem>>, %arg10: memref<24x32xf32, #tpu.memory_space<vmem>>) attributes {dimension_semantics = [#tpu.dimension_semantics<parallel>, #tpu.dimension_semantics<arbitrary>], iteration_bounds = array<i64: 1, 1>, scalar_prefetch = 0 : i64, scratch_operands = 1 : i64, tpu.core_type = #tpu.core_type<tc>, window_params = [{transform_indices = @transform_0, window_bounds = array<i64: 24, 32>}, {transform_indices = @transform_1, window_bounds = array<i64: 32, 128>}, {transform_indices = @transform_2, window_bounds = array<i64: 1, 128>}, {transform_indices = @transform_3, window_bounds = array<i64: 128, 32>}, {pipeline_mode = #tpu.pipeline_mode<synchronous>, transform_indices = @transform_4, window_bounds = array<i64: 1, 32>}, {pipeline_mode = #tpu.pipeline_mode<synchronous>, transform_indices = @transform_5, window_bounds = array<i64: 1, 32>}, {pipeline_mode = #tpu.pipeline_mode<synchronous>, transform_indices = @transform_6, window_bounds = array<i64: 1, 32>}, {transform_indices = @transform_7, window_bounds = array<i64: 24, 32>}]} {
    %c0_i32 = arith.constant 0 : i32
    %0 = arith.cmpi eq, %arg1, %c0_i32 : i32
    %1 = arith.extui %0 : i1 to i32
    %c0_i32_0 = arith.constant 0 : i32
    %2 = arith.cmpi ne, %1, %c0_i32_0 : i32
    scf.if %2 {
      %cst_30 = arith.constant 0.000000e+00 : f32
      %57 = vector.broadcast %cst_30 : f32 to vector<24x32xf32>
      %c0_31 = arith.constant 0 : index
      %c0_32 = arith.constant 0 : index
      %58 = vector.load %arg10[%c0_31, %c0_32] : memref<24x32xf32, #tpu.memory_space<vmem>>, vector<24x32xf32>
      tpu.vector_store %arg10[%c0_31, %c0_32], %57 {strides = array<i32>} : memref<24x32xf32, #tpu.memory_space<vmem>>, vector<24x32xf32>,
    } else {
    }
    %c0 = arith.constant 0 : index
    %c0_1 = arith.constant 0 : index
    %3 = vector.load %arg2[%c0, %c0_1] : memref<24x32xf32, #tpu.memory_space<vmem>>, vector<24x32xf32>
    %c0_2 = arith.constant 0 : index
    %c0_3 = arith.constant 0 : index
    %4 = vector.load %arg3[%c0_2, %c0_3] : memref<32x128xf32, #tpu.memory_space<vmem>>, vector<32x128xf32>
    %cst = arith.constant dense<0.000000e+00> : vector<24x128xf32>
    %5 = tpu.matmul %3, %4, %cst {dimension_numbers = #tpu.dot_dimension_numbers<[1], [0], [0], [1], [0, 0, 1, 1], [], []>} : vector<24x32xf32>, vector<32x128xf32>, vector<24x128xf32> -> vector<24x128xf32>
    %c0_4 = arith.constant 0 : index
    %c0_5 = arith.constant 0 : index
    %6 = vector.load %arg4[%c0_4, %c0_5] : memref<1x128xf32, #tpu.memory_space<vmem>>, vector<1x128xf32>
    %7 = vector.broadcast %6 : vector<1x128xf32> to vector<24x128xf32>
    %8 = arith.addf %5, %7 : vector<24x128xf32>
    %cst_6 = arith.constant 5.000000e-01 : f32
    %9 = vector.broadcast %cst_6 : f32 to vector<24x128xf32>
    %10 = arith.mulf %9, %8 : vector<24x128xf32>
    %cst_7 = arith.constant 0.707106769 : f32
    %11 = vector.broadcast %cst_7 : f32 to vector<24x128xf32>
    %12 = arith.mulf %8, %11 : vector<24x128xf32>
    %13 = math.absf %12 : vector<24x128xf32>
    %cst_8 = arith.constant 0.327591091 : f32
    %14 = vector.broadcast %cst_8 : f32 to vector<24x128xf32>
    %15 = arith.mulf %14, %13 : vector<24x128xf32>
    %cst_9 = arith.constant 1.000000e+00 : f32
    %16 = vector.broadcast %cst_9 : f32 to vector<24x128xf32>
    %17 = arith.addf %16, %15 : vector<24x128xf32>
    %cst_10 = arith.constant 1.000000e+00 : f32
    %18 = vector.broadcast %cst_10 : f32 to vector<24x128xf32>
    %19 = arith.divf %18, %17 : vector<24x128xf32>
    %cst_11 = arith.constant 1.06140542 : f32
    %20 = vector.broadcast %cst_11 : f32 to vector<24x128xf32>
    %21 = arith.mulf %20, %19 : vector<24x128xf32>
    %cst_12 = arith.constant -1.45315206 : f32
    %22 = vector.broadcast %cst_12 : f32 to vector<24x128xf32>
    %23 = arith.addf %21, %22 : vector<24x128xf32>
    %24 = arith.mulf %23, %19 : vector<24x128xf32>
    %cst_13 = arith.constant 1.42141378 : f32
    %25 = vector.broadcast %cst_13 : f32 to vector<24x128xf32>
    %26 = arith.addf %24, %25 : vector<24x128xf32>
    %27 = arith.mulf %26, %19 : vector<24x128xf32>
    %cst_14 = arith.constant -0.284496725 : f32
    %28 = vector.broadcast %cst_14 : f32 to vector<24x128xf32>
    %29 = arith.addf %27, %28 : vector<24x128xf32>
    %30 = arith.mulf %29, %19 : vector<24x128xf32>
    %cst_15 = arith.constant 0.254829586 : f32
    %31 = vector.broadcast %cst_15 : f32 to vector<24x128xf32>
    %32 = arith.addf %30, %31 : vector<24x128xf32>
    %33 = arith.mulf %32, %19 : vector<24x128xf32>
    %cst_16 = arith.constant 0.000000e+00 : f32
    %34 = vector.broadcast %cst_16 : f32 to vector<24x128xf32>
    %35 = arith.subf %34, %13 : vector<24x128xf32>
    %36 = arith.mulf %35, %13 : vector<24x128xf32>
    %37 = math.exp %36 : vector<24x128xf32>
    %38 = arith.mulf %33, %37 : vector<24x128xf32>
    %cst_17 = arith.constant 1.000000e+00 : f32
    %39 = vector.broadcast %cst_17 : f32 to vector<24x128xf32>
    %40 = arith.subf %39, %38 : vector<24x128xf32>
    %cst_18 = arith.constant 0.000000e+00 : f32
    %41 = vector.broadcast %cst_18 : f32 to vector<24x128xf32>
    %42 = arith.cmpf olt, %12, %41 : vector<24x128xf32>
    %cst_19 = arith.constant 0.000000e+00 : f32
    %43 = vector.broadcast %cst_19 : f32 to vector<24x128xf32>
    %44 = arith.subf %43, %40 : vector<24x128xf32>
    %45 = arith.select %42, %44, %40 : vector<24x128xi1>, vector<24x128xf32>
    %cst_20 = arith.constant 1.000000e+00 : f32
    %46 = vector.broadcast %cst_20 : f32 to vector<24x128xf32>
    %47 = arith.addf %46, %45 : vector<24x128xf32>
    %48 = arith.mulf %10, %47 : vector<24x128xf32>
    %c0_21 = arith.constant 0 : index
    %c0_22 = arith.constant 0 : index
    %49 = vector.load %arg10[%c0_21, %c0_22] : memref<24x32xf32, #tpu.memory_space<vmem>>, vector<24x32xf32>
    %c0_23 = arith.constant 0 : index
    %c0_24 = arith.constant 0 : index
    %50 = vector.load %arg5[%c0_23, %c0_24] : memref<128x32xf32, #tpu.memory_space<vmem>>, vector<128x32xf32>
    %cst_25 = arith.constant dense<0.000000e+00> : vector<24x32xf32>
    %51 = tpu.matmul %48, %50, %cst_25 {dimension_numbers = #tpu.dot_dimension_numbers<[1], [0], [0], [1], [0, 0, 1, 1], [], []>} : vector<24x128xf32>, vector<128x32xf32>, vector<24x32xf32> -> vector<24x32xf32>
    %52 = arith.addf %49, %51 : vector<24x32xf32>
    %c0_26 = arith.constant 0 : index
    %c0_27 = arith.constant 0 : index
    %53 = vector.load %arg10[%c0_26, %c0_27] : memref<24x32xf32, #tpu.memory_space<vmem>>, vector<24x32xf32>
    tpu.vector_store %arg10[%c0_26, %c0_27], %52 {strides = array<i32>} : memref<24x32xf32, #tpu.memory_space<vmem>>, vector<24x32xf32>,
    %c0_i32_28 = arith.constant 0 : i32
    %54 = arith.cmpi eq, %arg1, %c0_i32_28 : i32
    %55 = arith.extui %54 : i1 to i32
    %c0_i32_29 = arith.constant 0 : i32
    %56 = arith.cmpi ne, %55, %c0_i32_29 : i32
    scf.if %56 {
      %c0_30 = arith.constant 0 : index
      %c0_31 = arith.constant 0 : index
      %57 = vector.load %arg10[%c0_30, %c0_31] : memref<24x32xf32, #tpu.memory_space<vmem>>, vector<24x32xf32>
      %c0_32 = arith.constant 0 : index
      %c0_33 = arith.constant 0 : index
      %58 = vector.load %arg6[%c0_32, %c0_33] : memref<1x32xf32, #tpu.memory_space<vmem>>, vector<1x32xf32>
      %59 = vector.broadcast %58 : vector<1x32xf32> to vector<24x32xf32>
      %60 = arith.addf %57, %59 : vector<24x32xf32>
      %61 = arith.addf %60, %3 : vector<24x32xf32>
      %c0_34 = arith.constant 0 : index
      %c0_35 = arith.constant 0 : index
      %62 = vector.load %arg7[%c0_34, %c0_35] : memref<1x32xf32, #tpu.memory_space<vmem>>, vector<1x32xf32>
      %c0_36 = arith.constant 0 : index
      %c0_37 = arith.constant 0 : index
      %63 = vector.load %arg8[%c0_36, %c0_37] : memref<1x32xf32, #tpu.memory_space<vmem>>, vector<1x32xf32>
      %cst_38 = arith.constant dense<0.000000e+00> : vector<24xf32>
      %64 = vector.multi_reduction <add>, %61, %cst_38 [1] : vector<24x32xf32> to vector<24xf32>
      %65 = vector.shape_cast %64 : vector<24xf32> to vector<24x1xf32>
      %cst_39 = arith.constant 3.200000e+01 : f32
      %66 = vector.broadcast %cst_39 : f32 to vector<24x1xf32>
      %67 = arith.divf %65, %66 : vector<24x1xf32>
      %68 = vector.broadcast %67 : vector<24x1xf32> to vector<24x32xf32>
      %69 = arith.subf %61, %68 : vector<24x32xf32>
      %70 = arith.mulf %69, %69 : vector<24x32xf32>
      %cst_40 = arith.constant dense<0.000000e+00> : vector<24xf32>
      %71 = vector.multi_reduction <add>, %70, %cst_40 [1] : vector<24x32xf32> to vector<24xf32>
      %72 = vector.shape_cast %71 : vector<24xf32> to vector<24x1xf32>
      %cst_41 = arith.constant 3.200000e+01 : f32
      %73 = vector.broadcast %cst_41 : f32 to vector<24x1xf32>
      %74 = arith.divf %72, %73 : vector<24x1xf32>
      %75 = vector.broadcast %67 : vector<24x1xf32> to vector<24x32xf32>
      %76 = arith.subf %61, %75 : vector<24x32xf32>
      %cst_42 = arith.constant 9.99999974E-6 : f32
      %77 = vector.broadcast %cst_42 : f32 to vector<24x1xf32>
      %78 = arith.addf %74, %77 : vector<24x1xf32>
      %79 = math.rsqrt %78 : vector<24x1xf32>
      %80 = vector.broadcast %79 : vector<24x1xf32> to vector<24x32xf32>
      %81 = arith.mulf %76, %80 : vector<24x32xf32>
      %82 = vector.broadcast %62 : vector<1x32xf32> to vector<24x32xf32>
      %83 = arith.mulf %81, %82 : vector<24x32xf32>
      %84 = vector.broadcast %63 : vector<1x32xf32> to vector<24x32xf32>
      %85 = arith.addf %83, %84 : vector<24x32xf32>
      %c0_43 = arith.constant 0 : index
      %c0_44 = arith.constant 0 : index
      %86 = vector.load %arg9[%c0_43, %c0_44] : memref<24x32xf32, #tpu.memory_space<vmem>>, vector<24x32xf32>
      tpu.vector_store %arg9[%c0_43, %c0_44], %85 {strides = array<i32>} : memref<24x32xf32, #tpu.memory_space<vmem>>, vector<24x32xf32>,
    } else {
    }
    return
  }
  func.func @transform_0(%arg0: i32, %arg1: i32) -> (i32, i32) {
    %c0_i32 = arith.constant 0 : i32
    %c0_i32_0 = arith.constant 0 : i32
    return %arg0, %c0_i32 : i32, i32
  }
  func.func @transform_1(%arg0: i32, %arg1: i32) -> (i32, i32) {
    %c0_i32 = arith.constant 0 : i32
    %c0_i32_0 = arith.constant 0 : i32
    return %c0_i32, %arg1 : i32, i32
  }
  func.func @transform_2(%arg0: i32, %arg1: i32) -> (i32, i32) {
    %c0_i32 = arith.constant 0 : i32
    %c0_i32_0 = arith.constant 0 : i32
    return %c0_i32, %arg1 : i32, i32
  }
  func.func @transform_3(%arg0: i32, %arg1: i32) -> (i32, i32) {
    %c0_i32 = arith.constant 0 : i32
    %c0_i32_0 = arith.constant 0 : i32
    return %arg1, %c0_i32 : i32, i32
  }
  func.func @transform_4(%arg0: i32, %arg1: i32) -> (i32, i32) {
    %c0_i32 = arith.constant 0 : i32
    %c0_i32_0 = arith.constant 0 : i32
    %c0_i32_1 = arith.constant 0 : i32
    return %c0_i32, %c0_i32_0 : i32, i32
  }
  func.func @transform_5(%arg0: i32, %arg1: i32) -> (i32, i32) {
    %c0_i32 = arith.constant 0 : i32
    %c0_i32_0 = arith.constant 0 : i32
    %c0_i32_1 = arith.constant 0 : i32
    return %c0_i32, %c0_i32_0 : i32, i32
  }
  func.func @transform_6(%arg0: i32, %arg1: i32) -> (i32, i32) {
    %c0_i32 = arith.constant 0 : i32
    %c0_i32_0 = arith.constant 0 : i32
    %c0_i32_1 = arith.constant 0 : i32
    return %c0_i32, %c0_i32_0 : i32, i32
  }
  func.func @transform_7(%arg0: i32, %arg1: i32) -> (i32, i32) {
    %c0_i32 = arith.constant 0 : i32
    %c0_i32_0 = arith.constant 0 : i32
    return %arg0, %c0_i32 : i32, i32
  }
}

module attributes {stable_mosaic.version = 11 : i64} {
  func.func @_decoder_kernel(%arg0: i32, %arg1: memref<24x32xf32, #tpu.memory_space<vmem>>, %arg2: memref<32x128xf32, #tpu.memory_space<vmem>>, %arg3: memref<1x128xf32, #tpu.memory_space<vmem>>, %arg4: memref<1x128xf32, #tpu.memory_space<vmem>>, %arg5: memref<1x128xf32, #tpu.memory_space<vmem>>, %arg6: memref<128x128xf32, #tpu.memory_space<vmem>>, %arg7: memref<1x128xf32, #tpu.memory_space<vmem>>, %arg8: memref<24x128xf32, #tpu.memory_space<vmem>>) attributes {dimension_semantics = [#tpu.dimension_semantics<parallel>], iteration_bounds = array<i64: 1>, scalar_prefetch = 0 : i64, scratch_operands = 0 : i64, tpu.core_type = #tpu.core_type<tc>, window_params = [{transform_indices = @transform_0, window_bounds = array<i64: 24, 32>}, {pipeline_mode = #tpu.pipeline_mode<synchronous>, transform_indices = @transform_1, window_bounds = array<i64: 32, 128>}, {pipeline_mode = #tpu.pipeline_mode<synchronous>, transform_indices = @transform_2, window_bounds = array<i64: 1, 128>}, {pipeline_mode = #tpu.pipeline_mode<synchronous>, transform_indices = @transform_3, window_bounds = array<i64: 1, 128>}, {pipeline_mode = #tpu.pipeline_mode<synchronous>, transform_indices = @transform_4, window_bounds = array<i64: 1, 128>}, {pipeline_mode = #tpu.pipeline_mode<synchronous>, transform_indices = @transform_5, window_bounds = array<i64: 128, 128>}, {pipeline_mode = #tpu.pipeline_mode<synchronous>, transform_indices = @transform_6, window_bounds = array<i64: 1, 128>}, {transform_indices = @transform_7, window_bounds = array<i64: 24, 128>}]} {
    %c0 = arith.constant 0 : index
    %c0_0 = arith.constant 0 : index
    %0 = vector.load %arg1[%c0, %c0_0] : memref<24x32xf32, #tpu.memory_space<vmem>>, vector<24x32xf32>
    %c0_1 = arith.constant 0 : index
    %c0_2 = arith.constant 0 : index
    %1 = vector.load %arg2[%c0_1, %c0_2] : memref<32x128xf32, #tpu.memory_space<vmem>>, vector<32x128xf32>
    %cst = arith.constant dense<0.000000e+00> : vector<24x128xf32>
    %2 = tpu.matmul %0, %1, %cst {dimension_numbers = #tpu.dot_dimension_numbers<[1], [0], [0], [1], [0, 0, 1, 1], [], []>} : vector<24x32xf32>, vector<32x128xf32>, vector<24x128xf32> -> vector<24x128xf32>
    %c0_3 = arith.constant 0 : index
    %c0_4 = arith.constant 0 : index
    %3 = vector.load %arg3[%c0_3, %c0_4] : memref<1x128xf32, #tpu.memory_space<vmem>>, vector<1x128xf32>
    %4 = vector.broadcast %3 : vector<1x128xf32> to vector<24x128xf32>
    %5 = arith.addf %2, %4 : vector<24x128xf32>
    %6 = tpu.iota {dimensions = array<i32: 1>} : vector<24x128xi32>
    %c16_i32 = arith.constant 16 : i32
    %7 = vector.broadcast %c16_i32 : i32 to vector<24x128xi32>
    %8 = arith.cmpi slt, %6, %7 : vector<24x128xi32>
    %9 = arith.extui %8 : vector<24x128xi1> to vector<24x128xi32>
    %10 = arith.sitofp %9 : vector<24x128xi32> to vector<24x128xf32>
    %11 = arith.mulf %5, %10 : vector<24x128xf32>
    %cst_5 = arith.constant dense<0.000000e+00> : vector<24xf32>
    %12 = vector.multi_reduction <add>, %11, %cst_5 [1] : vector<24x128xf32> to vector<24xf32>
    %13 = vector.shape_cast %12 : vector<24xf32> to vector<24x1xf32>
    %cst_6 = arith.constant 1.600000e+01 : f32
    %14 = vector.broadcast %cst_6 : f32 to vector<24x1xf32>
    %15 = arith.divf %13, %14 : vector<24x1xf32>
    %16 = vector.broadcast %15 : vector<24x1xf32> to vector<24x128xf32>
    %17 = arith.subf %11, %16 : vector<24x128xf32>
    %18 = arith.mulf %17, %10 : vector<24x128xf32>
    %19 = arith.mulf %18, %18 : vector<24x128xf32>
    %cst_7 = arith.constant dense<0.000000e+00> : vector<24xf32>
    %20 = vector.multi_reduction <add>, %19, %cst_7 [1] : vector<24x128xf32> to vector<24xf32>
    %21 = vector.shape_cast %20 : vector<24xf32> to vector<24x1xf32>
    %cst_8 = arith.constant 1.600000e+01 : f32
    %22 = vector.broadcast %cst_8 : f32 to vector<24x1xf32>
    %23 = arith.divf %21, %22 : vector<24x1xf32>
    %cst_9 = arith.constant 9.99999974E-6 : f32
    %24 = vector.broadcast %cst_9 : f32 to vector<24x1xf32>
    %25 = arith.addf %23, %24 : vector<24x1xf32>
    %26 = math.rsqrt %25 : vector<24x1xf32>
    %27 = vector.broadcast %26 : vector<24x1xf32> to vector<24x128xf32>
    %28 = arith.mulf %18, %27 : vector<24x128xf32>
    %c0_10 = arith.constant 0 : index
    %c0_11 = arith.constant 0 : index
    %29 = vector.load %arg4[%c0_10, %c0_11] : memref<1x128xf32, #tpu.memory_space<vmem>>, vector<1x128xf32>
    %30 = vector.broadcast %29 : vector<1x128xf32> to vector<24x128xf32>
    %31 = arith.mulf %28, %30 : vector<24x128xf32>
    %c0_12 = arith.constant 0 : index
    %c0_13 = arith.constant 0 : index
    %32 = vector.load %arg5[%c0_12, %c0_13] : memref<1x128xf32, #tpu.memory_space<vmem>>, vector<1x128xf32>
    %33 = vector.broadcast %32 : vector<1x128xf32> to vector<24x128xf32>
    %34 = arith.addf %31, %33 : vector<24x128xf32>
    %cst_14 = arith.constant 0.000000e+00 : f32
    %35 = vector.broadcast %cst_14 : f32 to vector<24x128xf32>
    %36 = arith.maximumf %34, %35 : vector<24x128xf32>
    %c0_15 = arith.constant 0 : index
    %c0_16 = arith.constant 0 : index
    %37 = vector.load %arg6[%c0_15, %c0_16] : memref<128x128xf32, #tpu.memory_space<vmem>>, vector<128x128xf32>
    %cst_17 = arith.constant dense<0.000000e+00> : vector<24x128xf32>
    %38 = tpu.matmul %36, %37, %cst_17 {dimension_numbers = #tpu.dot_dimension_numbers<[1], [0], [0], [1], [0, 0, 1, 1], [], []>} : vector<24x128xf32>, vector<128x128xf32>, vector<24x128xf32> -> vector<24x128xf32>
    %c0_18 = arith.constant 0 : index
    %c0_19 = arith.constant 0 : index
    %39 = vector.load %arg7[%c0_18, %c0_19] : memref<1x128xf32, #tpu.memory_space<vmem>>, vector<1x128xf32>
    %40 = vector.broadcast %39 : vector<1x128xf32> to vector<24x128xf32>
    %41 = arith.addf %38, %40 : vector<24x128xf32>
    %c0_20 = arith.constant 0 : index
    %c0_21 = arith.constant 0 : index
    %42 = vector.load %arg8[%c0_20, %c0_21] : memref<24x128xf32, #tpu.memory_space<vmem>>, vector<24x128xf32>
    tpu.vector_store %arg8[%c0_20, %c0_21], %41 {strides = array<i32>} : memref<24x128xf32, #tpu.memory_space<vmem>>, vector<24x128xf32>,
    return
  }
  func.func @transform_0(%arg0: i32) -> (i32, i32) {
    %c0_i32 = arith.constant 0 : i32
    %c0_i32_0 = arith.constant 0 : i32
    return %arg0, %c0_i32 : i32, i32
  }
  func.func @transform_1(%arg0: i32) -> (i32, i32) {
    %c0_i32 = arith.constant 0 : i32
    %c0_i32_0 = arith.constant 0 : i32
    %c0_i32_1 = arith.constant 0 : i32
    return %c0_i32, %c0_i32_0 : i32, i32
  }
  func.func @transform_2(%arg0: i32) -> (i32, i32) {
    %c0_i32 = arith.constant 0 : i32
    %c0_i32_0 = arith.constant 0 : i32
    %c0_i32_1 = arith.constant 0 : i32
    return %c0_i32, %c0_i32_0 : i32, i32
  }
  func.func @transform_3(%arg0: i32) -> (i32, i32) {
    %c0_i32 = arith.constant 0 : i32
    %c0_i32_0 = arith.constant 0 : i32
    %c0_i32_1 = arith.constant 0 : i32
    return %c0_i32, %c0_i32_0 : i32, i32
  }
  func.func @transform_4(%arg0: i32) -> (i32, i32) {
    %c0_i32 = arith.constant 0 : i32
    %c0_i32_0 = arith.constant 0 : i32
    %c0_i32_1 = arith.constant 0 : i32
    return %c0_i32, %c0_i32_0 : i32, i32
  }
  func.func @transform_5(%arg0: i32) -> (i32, i32) {
    %c0_i32 = arith.constant 0 : i32
    %c0_i32_0 = arith.constant 0 : i32
    %c0_i32_1 = arith.constant 0 : i32
    return %c0_i32, %c0_i32_0 : i32, i32
  }
  func.func @transform_6(%arg0: i32) -> (i32, i32) {
    %c0_i32 = arith.constant 0 : i32
    %c0_i32_0 = arith.constant 0 : i32
    %c0_i32_1 = arith.constant 0 : i32
    return %c0_i32, %c0_i32_0 : i32, i32
  }
  func.func @transform_7(%arg0: i32) -> (i32, i32) {
    %c0_i32 = arith.constant 0 : i32
    %c0_i32_0 = arith.constant 0 : i32
    return %arg0, %c0_i32 : i32, i32
  }
}

</mosaic_0001>

<llo_original>
// kernel: clibert_forward.6
$region0: #{clibert_forward.6}
  #allocation0 [shape = 'u32[]', space=smem, size = 0x4, offset = 0x4, fixed_abs, tag = 'smem constant byte address 0x4 - core index']
  #allocation1 [shape = 'u32[72,128]{1,0:T(1,128)}', space=vmem, size = 0x9000, scoped, tag = 'internal scratch']
  %s0 = inlined_call_operand.vmem [shape: f32[2,12,32], index: 0, kind: input, shape index: {}]
  %s1 = inlined_call_operand.vmem [shape: f32[12,32], index: 1, kind: input, shape index: {}]
  %s2 = inlined_call_operand.vmem [shape: f32[2,12,32], index: 2, kind: output, shape index: {}]
  %s3 = sld [smem:[#allocation0]]
  $region41: #{clibert_forward.6} parent=0
    _
  %s5 = ssub.s32 1, %s3
  %s6 = scalar_select 0, %s5, %s3
  loop: start=0, step=1, limit=4
  $region2: #{clibert_forward.6} parent=0 // loop_pre_header
    _
  $region3: #{clibert_forward.6} parent=0 // loop_header
    %s8 = sphi 0, %s12
    %p9 = scmp.ge.s32.totalorder %s8, 4
    %s15 = sphi 0, %s27
    %s16 = sphi 0, %s23
    %s17 = sphi 0, %s15
    %s18 = sphi 0, %s16
    %s19 = sphi 0, %s17
    %s20 = sphi 0, %s18
    %s32 = sphi 0, %s34
    %s35 = sphi 0, %s32
    %s36 = sphi 0, %s35
    %s52 = sphi 0, %s36
    %s58 = sphi 0, %s60
    %s61 = sphi 0, %s58
    %s62 = sphi 0, %s61
    %s78 = sphi 0, %s62
    %s86 = sphi 0, %s88
    %s89 = sphi 0, %s86
    %s90 = sphi 0, %s89
    %s106 = sphi 0, %s90
  $region4: #{clibert_forward.6} parent=0 // loop_header_branch
    %11 = sbr.rel (%p9) target = $region8
  $region5: #{clibert_forward.6} parent=0 // loop_body
    %s13 = ssub.s32 %s8, 1
    %s14 = ssub.s32 %s8, 2
    %s21 = sadd.s32 1, %s16
    %p22 = scmp.ge.s32.totalorder %s21, 1
    %s23 = scalar_select %p22, 0, %s21
    %s24 = sadd.s32 1, %s15
    %s25 = scalar_select %p22, %s24, %s15
    %p26 = scmp.ge.s32.totalorder %s25, 2
    %s27 = scalar_select %p26, 0, %s25
    %s28 = ssub.s32 %s15, %s27
    %s29 = ssub.s32 %s16, %s23
    %s30 = sor.u32 %s28, %s29
    %p31 = scmp.eq.s32.totalorder %s30, 0
    %s33 = sadd.s32 %s32, 1
    %s34 = scalar_select %p31, %s32, %s33
    %p37 = pneg %p31
    %p38 = scmp.eq.s32.totalorder %s8, 1
    %p39 = por %p37, %p38
    %p40 = scmp.ne.s32.totalorder %s32, %s35
    %p41 = scmp.eq.s32.totalorder %s8, 0
    %p42 = por %p40, %p41
    %p43 = scmp.ne.s32.totalorder %s32, %s35
    %p44 = scmp.eq.s32.totalorder %s13, 1
    %p45 = por %p43, %p44
    %p46 = scmp.ne.s32.totalorder %s35, %s36
    %p47 = scmp.eq.s32.totalorder %s13, 0
    %p48 = por %p46, %p47
    %p49 = scmp.ne.s32.totalorder %s35, %s36
    %p50 = scmp.eq.s32.totalorder %s14, 1
    %p51 = por %p49, %p50
    %p53 = scmp.ne.s32.totalorder %s36, %s52
    %p54 = scmp.eq.s32.totalorder %s14, 0
    %p55 = por %p53, %p54
    %s56 = ssub.s32 %s16, %s23
    %p57 = scmp.eq.s32.totalorder %s56, 0
    %s59 = sadd.s32 %s58, 1
    %s60 = scalar_select %p57, %s58, %s59
    %p63 = pneg %p57
    %p64 = scmp.eq.s32.totalorder %s8, 1
    %p65 = por %p63, %p64
    %p66 = scmp.ne.s32.totalorder %s58, %s61
    %p67 = scmp.eq.s32.totalorder %s8, 0
    %p68 = por %p66, %p67
    %p69 = scmp.ne.s32.totalorder %s58, %s61
    %p70 = scmp.eq.s32.totalorder %s13, 1
    %p71 = por %p69, %p70
    %p72 = scmp.ne.s32.totalorder %s61, %s62
    %p73 = scmp.eq.s32.totalorder %s13, 0
    %p74 = por %p72, %p73
    %p75 = scmp.ne.s32.totalorder %s61, %s62
    %p76 = scmp.eq.s32.totalorder %s14, 1
    %p77 = por %p75, %p76
    %p79 = scmp.ne.s32.totalorder %s62, %s78
    %p80 = scmp.eq.s32.totalorder %s14, 0
    %p81 = por %p79, %p80
    %s82 = ssub.s32 %s15, %s27
    %s83 = ssub.s32 %s16, %s23
    %s84 = sor.u32 %s82, %s83
    %p85 = scmp.eq.s32.totalorder %s84, 0
    %s87 = sadd.s32 %s86, 1
    %s88 = scalar_select %p85, %s86, %s87
    %p91 = pneg %p85
    %p92 = scmp.eq.s32.totalorder %s8, 1
    %p93 = por %p91, %p92
    %p94 = scmp.ne.s32.totalorder %s86, %s89
    %p95 = scmp.eq.s32.totalorder %s8, 0
    %p96 = por %p94, %p95
    %p97 = scmp.ne.s32.totalorder %s86, %s89
    %p98 = scmp.eq.s32.totalorder %s13, 1
    %p99 = por %p97, %p98
    %p100 = scmp.ne.s32.totalorder %s89, %s90
    %p101 = scmp.eq.s32.totalorder %s13, 0
    %p102 = por %p100, %p101
    %p103 = scmp.ne.s32.totalorder %s89, %s90
    %p104 = scmp.eq.s32.totalorder %s14, 1
    %p105 = por %p103, %p104
    %p107 = scmp.ne.s32.totalorder %s90, %s106
    %p108 = scmp.eq.s32.totalorder %s14, 0
    %p109 = por %p107, %p108
    %p110 = scmp.le.s32.totalorder 1, %s8
    %p111 = scmp.lt.s32.totalorder %s8, 3
    %p112 = pnand %p110, %p111
    %p113 = pneg %p112
    // Predicated region
    $region9: #{clibert_forward.6} parent=5 // pred_check
      _
    $region10: #{clibert_forward.6} parent=5 // pred_check_branch
      %115 = sbr.rel (%p112) target = $region12
    $region11: #{clibert_forward.6} parent=5 // pred_region
      %s116 = ssub.s32 %s8, 1
      // Predicated region
      $region13: #{clibert_forward.6} parent=11 // pred_check
        %p117 = pneg %p74
      $region14: #{clibert_forward.6} parent=11 // pred_check_branch
        %119 = sbr.rel (%p117) target = $region16
      $region15: #{clibert_forward.6} parent=11 // pred_region
        %s120 = smul.u32 2, %s18
        %p121 = scmp.lt.s32.totalorder %s120, 1
        %s122 = scalar_select %p121, %s120, 1
        %s123 = smul.addr %s122, 8
        %s124 = scalar_lea.vmem %s1, %s123
        %s125 = smul.u32 2, %s18
      $region16: #{clibert_forward.6} parent=11 // pred_fallthru
        _
    $region12: #{clibert_forward.6} parent=5 // pred_fallthru
      _
    %p126 = scmp.lt.s32.totalorder %s8, 2
    // Predicated region
    $region17: #{clibert_forward.6} parent=5 // pred_check
      %p127 = pneg %p126
    $region18: #{clibert_forward.6} parent=5 // pred_check_branch
      %129 = sbr.rel (%p127) target = $region20
    $region19: #{clibert_forward.6} parent=5 // pred_region
      // Predicated region
      $region21: #{clibert_forward.6} parent=19 // pred_check
        %p130 = pneg %p42
      $region22: #{clibert_forward.6} parent=19 // pred_check_branch
        %132 = sbr.rel (%p130) target = $region24
      $region23: #{clibert_forward.6} parent=19 // pred_region
        %s133 = smul.u32 2, %s16
        %p134 = scmp.lt.s32.totalorder %s15, 1
        %s135 = scalar_select %p134, %s15, 1
        %p136 = scmp.lt.s32.totalorder %s133, 1
        %s137 = scalar_select %p136, %s133, 1
        %s138 = smul.addr %s135, 2
        %s139 = sadd.s32 %s137, %s138
        %s140 = smul.addr %s139, 8
        %s141 = scalar_lea.vmem %s0, %s140
        %s142 = smul.u32 2, %s16
      $region24: #{clibert_forward.6} parent=19 // pred_fallthru
        _
    $region20: #{clibert_forward.6} parent=5 // pred_fallthru
      _
    %p143 = scmp.le.s32.totalorder 1, %s8
    %p144 = scmp.lt.s32.totalorder %s8, 3
    %p145 = pnand %p143, %p144
    %p146 = pneg %p145
    // Predicated region
    $region25: #{clibert_forward.6} parent=5 // pred_check
      _
    $region26: #{clibert_forward.6} parent=5 // pred_check_branch
      %148 = sbr.rel (%p145) target = $region28
    $region27: #{clibert_forward.6} parent=5 // pred_region
      %s149 = ssub.s32 %s8, 1
      %s150 = smul.u32 2, %s18
      %p151 = scmp.lt.s32.totalorder %s17, 1
      %s152 = scalar_select %p151, %s17, 1
      %p153 = scmp.lt.s32.totalorder %s150, 1
      %s154 = scalar_select %p153, %s150, 1
      %s155 = smul.addr %s152, 2
      %s156 = sadd.s32 %s154, %s155
      %s157 = smul.addr %s156, 8
      %s158 = scalar_lea.vmem %s0, %s157
      %p159 = pneg %p48
      %p160 = pneg %p45
      %s161 = smul.u32 2, %s18
      %p162 = scmp.lt.s32.totalorder %s161, 1
      %s163 = scalar_select %p162, %s161, 1
      %s164 = smul.addr %s163, 8
      %s165 = scalar_lea.vmem %s1, %s164
      %p166 = pneg %p74
      %p167 = pneg %p71
      %p168 = pneg %p102
      %p169 = pneg %p99
      %s170 = smul.u32 2, %s18
      %p171 = scmp.lt.s32.totalorder %s17, 1
      %s172 = scalar_select %p171, %s17, 1
      %p173 = scmp.lt.s32.totalorder %s170, 1
      %s174 = scalar_select %p173, %s170, 1
      %s175 = smul.addr %s172, 2
      %s176 = sadd.s32 %s174, %s175
      %s177 = smul.addr %s176, 8
      %s178 = scalar_lea.vmem %s2, %s177
      %s179 = smul.u32 2, %s18
      %p180 = scmp.lt.s32.totalorder %s17, 1
      %s181 = scalar_select %p180, %s17, 1
      %p182 = scmp.lt.s32.totalorder %s179, 1
      %s183 = scalar_select %p182, %s179, 1
      %s184 = smul.addr %s181, 2
      %s185 = sadd.s32 %s183, %s184
      %s186 = smul.addr %s185, 8
      %s187 = scalar_lea.vmem %s0, %s186
      %s188 = smul.u32 2, %s18
      %s189 = smul.u32 2, %s18
      %p190 = scmp.lt.s32.totalorder %s189, 1
      %s191 = scalar_select %p190, %s189, 1
      %s192 = smul.addr %s191, 8
      %s193 = scalar_lea.vmem %s1, %s192
      %s194 = smul.u32 2, %s18
      %s195 = smul.u32 2, %s18
      %p196 = scmp.lt.s32.totalorder %s17, 1
      %s197 = scalar_select %p196, %s17, 1
      %p198 = scmp.lt.s32.totalorder %s195, 1
      %s199 = scalar_select %p198, %s195, 1
      %s200 = smul.addr %s197, 2
      %s201 = sadd.s32 %s199, %s200
      %s202 = smul.addr %s201, 8
      %s203 = scalar_lea.vmem %s2, %s202
      %s204 = smul.u32 2, %s18
      %v205 = vld [vmem:[%s187] sm:$0xff]
      %v206 = vld [vmem:[%s187 + $0x8] sm:$0xf]
      %v207 = vld [vmem:[%s193] sm:$0xff]
      %v208 = vld [vmem:[%s193 + $0x8] sm:$0xf]
      %v209 = vadd.f32 %v205, %v207
      %v210 = vadd.f32 %v206, %v208
      %v211 = vmul.f32 %v209, 5.656854
      %v212 = vmul.f32 %v210, 5.656854
      %vm213 = vcmask 261120
      %214 = vst.msk [vmem:[%s203] sm:$0xff] %vm213, %v211
      %vm215 = vcmask 257024
      %216 = vst.msk [vmem:[%s203 + $0x8] sm:$0xf] %vm215, %v212
      %s217 = smul.u32 2, %s18
      %p218 = scmp.lt.s32.totalorder %s17, 1
      %s219 = scalar_select %p218, %s17, 1
      %p220 = scmp.lt.s32.totalorder %s217, 1
      %s221 = scalar_select %p220, %s217, 1
      %s222 = smul.addr %s219, 2
      %s223 = sadd.s32 %s221, %s222
      %s224 = smul.addr %s223, 8
      %s225 = scalar_lea.vmem %s2, %s224
      // Predicated region
      $region29: #{clibert_forward.6} parent=27 // pred_check
        %p226 = pneg %p99
      $region30: #{clibert_forward.6} parent=27 // pred_check_branch
        %228 = sbr.rel (%p226) target = $region32
      $region31: #{clibert_forward.6} parent=27 // pred_region
        %s229 = smul.u32 2, %s18
      $region32: #{clibert_forward.6} parent=27 // pred_fallthru
        _
    $region28: #{clibert_forward.6} parent=5 // pred_fallthru
      _
    %p230 = scmp.le.s32.totalorder 2, %s8
    // Predicated region
    $region33: #{clibert_forward.6} parent=5 // pred_check
      %p231 = pneg %p230
    $region34: #{clibert_forward.6} parent=5 // pred_check_branch
      %233 = sbr.rel (%p231) target = $region36
    $region35: #{clibert_forward.6} parent=5 // pred_region
      %s234 = ssub.s32 %s8, 2
      // Predicated region
      $region37: #{clibert_forward.6} parent=35 // pred_check
        %p235 = pneg %p105
      $region38: #{clibert_forward.6} parent=35 // pred_check_branch
        %237 = sbr.rel (%p235) target = $region40
      $region39: #{clibert_forward.6} parent=35 // pred_region
        %s238 = smul.u32 2, %s20
        %p239 = scmp.lt.s32.totalorder %s19, 1
        %s240 = scalar_select %p239, %s19, 1
        %p241 = scmp.lt.s32.totalorder %s238, 1
        %s242 = scalar_select %p241, %s238, 1
        %s243 = smul.addr %s240, 2
        %s244 = sadd.s32 %s242, %s243
        %s245 = smul.addr %s244, 8
        %s246 = scalar_lea.vmem %s2, %s245
      $region40: #{clibert_forward.6} parent=35 // pred_fallthru
        _
    $region36: #{clibert_forward.6} parent=5 // pred_fallthru
      _
  $region6: #{clibert_forward.6} parent=0 // loop_footer
    %s12 = sadd.s32 1, %s8
  $region7: #{clibert_forward.6} parent=0 // loop_footer_branch
    %7 = sbr.rel target = $region3
  $region8: #{clibert_forward.6} parent=0 // loop_exit
    _

// kernel: clibert_forward.8
$region0: #{clibert_forward.8}
  #allocation0 [shape = 'u32[]', space=smem, size = 0x4, offset = 0x4, fixed_abs, tag = 'smem constant byte address 0x4 - core index']
  #allocation1 [shape = 'u32[72,128]{1,0:T(1,128)}', space=vmem, size = 0x9000, scoped, tag = 'internal scratch']
  #allocation2 [shape = 'f32[24,32]{1,0:T(8,128)}', space=vmem, size = 0x3000, scoped, tag = 'scratch operand']
  %s0 = inlined_call_operand.vmem [shape: f32[24,32], index: 0, kind: input, shape index: {}]
  %s1 = inlined_call_operand.vmem [shape: f32[32,128], index: 1, kind: input, shape index: {}]
  %s2 = inlined_call_operand.vmem [shape: f32[1,128], index: 2, kind: input, shape index: {}]
  %s3 = inlined_call_operand.vmem [shape: f32[128,32], index: 3, kind: input, shape index: {}]
  %s4 = inlined_call_operand.vmem [shape: f32[1,32], index: 4, kind: input, shape index: {}]
  %s5 = inlined_call_operand.vmem [shape: f32[1,32], index: 5, kind: input, shape index: {}]
  %s6 = inlined_call_operand.vmem [shape: f32[1,32], index: 6, kind: input, shape index: {}]
  %s7 = inlined_call_operand.vmem [shape: f32[24,32], index: 7, kind: output, shape index: {}]
  %s8 = sld [smem:[#allocation0]]
  $region46: #{clibert_forward.8} parent=0
    _
  %s10 = ssub.s32 1, %s8
  %s11 = scalar_select 0, %s10, %s8
  // Predicated region
  $region2: #{clibert_forward.8} parent=0 // pred_check
    _
  $region3: #{clibert_forward.8} parent=0 // pred_check_branch
    %13 = sbr.rel (0) target = $region5
  $region4: #{clibert_forward.8} parent=0 // pred_region
    _
  $region5: #{clibert_forward.8} parent=0 // pred_fallthru
    _
  // Predicated region
  $region6: #{clibert_forward.8} parent=0 // pred_check
    _
  $region7: #{clibert_forward.8} parent=0 // pred_check_branch
    %15 = sbr.rel (0) target = $region9
  $region8: #{clibert_forward.8} parent=0 // pred_region
    _
  $region9: #{clibert_forward.8} parent=0 // pred_fallthru
    _
  // Predicated region
  $region10: #{clibert_forward.8} parent=0 // pred_check
    _
  $region11: #{clibert_forward.8} parent=0 // pred_check_branch
    %17 = sbr.rel (0) target = $region13
  $region12: #{clibert_forward.8} parent=0 // pred_region
    _
  $region13: #{clibert_forward.8} parent=0 // pred_fallthru
    _
  // Predicated region
  $region14: #{clibert_forward.8} parent=0 // pred_check
    _
  $region15: #{clibert_forward.8} parent=0 // pred_check_branch
    %19 = sbr.rel (0) target = $region17
  $region16: #{clibert_forward.8} parent=0 // pred_region
    _
  $region17: #{clibert_forward.8} parent=0 // pred_fallthru
    _
  // Predicated region
  $region18: #{clibert_forward.8} parent=0 // pred_check
    _
  $region19: #{clibert_forward.8} parent=0 // pred_check_branch
    %21 = sbr.rel (0) target = $region21
  $region20: #{clibert_forward.8} parent=0 // pred_region
    _
  $region21: #{clibert_forward.8} parent=0 // pred_fallthru
    _
  // Predicated region
  $region22: #{clibert_forward.8} parent=0 // pred_check
    _
  $region23: #{clibert_forward.8} parent=0 // pred_check_branch
    %23 = sbr.rel (0) target = $region25
  $region24: #{clibert_forward.8} parent=0 // pred_region
    _
  $region25: #{clibert_forward.8} parent=0 // pred_fallthru
    _
  // Predicated region
  $region26: #{clibert_forward.8} parent=0 // pred_check
    _
  $region27: #{clibert_forward.8} parent=0 // pred_check_branch
    %25 = sbr.rel (0) target = $region29
  $region28: #{clibert_forward.8} parent=0 // pred_region
    _
  $region29: #{clibert_forward.8} parent=0 // pred_fallthru
    _
  %p26 = scmp.eq.s32.totalorder 0, 0
  // Predicated region
  $region30: #{clibert_forward.8} parent=0 // pred_check
    %p27 = pneg %p26
  $region31: #{clibert_forward.8} parent=0 // pred_check_branch
    %29 = sbr.rel (%p27) target = $region33
  $region32: #{clibert_forward.8} parent=0 // pred_region
    %vm30 = vcmask 261120
    %31 = vst.msk [vmem:[#allocation2] sm:$0xff] %vm30, 0.0
    %32 = vst.msk [vmem:[#allocation2 + $0x8] sm:$0xff] %vm30, 0.0
    %33 = vst.msk [vmem:[#allocation2 + $0x10] sm:$0xff] %vm30, 0.0
  $region33: #{clibert_forward.8} parent=0 // pred_fallthru
    _
  %v34 = vld [vmem:[%s0] sm:$0xff]
  %v35 = vld [vmem:[%s0 + $0x8] sm:$0xff]
  %v36 = vld [vmem:[%s0 + $0x10] sm:$0xff]
  %v37 = vld [vmem:[%s1] sm:$0xff]
  %v38 = vld [vmem:[%s1 + $0x8] sm:$0xff]
  %v39 = vld [vmem:[%s1 + $0x10] sm:$0xff]
  %v40 = vld [vmem:[%s1 + $0x18] sm:$0xff]
  %v41 = vld [vmem:[%s2] sm:$0x1]
  %v43 = vperm.slane %v41, 0
  %vm45 = vcmask 261120
  %v47 = vsel %vm45, %v34, 0
  %v50 = vsel %vm45, %v35, 0
  %v53 = vsel %vm45, %v36, 0
  %55 = vmatpush.msra.mxu0 0.0
  %56 = vmatpush.msra.mxu0 0.0
  %57 = vmatpush.msra.mxu0 0.0
  %58 = vmatpush.msra.mxu0 0.0
  %59 = vmatpush.msra.mxu0 0.0
  %60 = vmatpush.msra.mxu0 0.0
  %61 = vmatpush.msra.mxu0 0.0
  %62 = vmatpush.msra.mxu0 0.0
  %63 = vmatpush.msra.mxu0 0.0
  %64 = vmatpush.msra.mxu0 0.0
  %65 = vmatpush.msra.mxu0 0.0
  %66 = vmatpush.msra.mxu0 0.0
  %67 = vmatpush.msra.mxu0 %v40
  %68 = vmatpush.msra.mxu0 %v39
  %69 = vmatpush.msra.mxu0 %v38
  %70 = vmatpush.msra.mxu0 %v37
  %71 = vmatmul.f32.gmra.mxu0 %v47
  %v72 = vpop.f32.mrf.mxu0
  %v73 = vadd.f32 %v43, %v72
  %74 = vmatmul.f32.gmra.mxu0 %v50
  %v75 = vpop.f32.mrf.mxu0
  %v76 = vadd.f32 %v43, %v75
  %77 = vmatmul.f32.gmra.mxu0 %v53
  %v78 = vpop.f32.mrf.mxu0
  %v79 = vadd.f32 %v43, %v78
  %80 = vdwg.mxu0
  %v81 = vmul.f32 %v73, 0.5
  %v82 = vmul.f32 %v76, 0.5
  %v83 = vmul.f32 %v79, 0.5
  %v84 = vmul.f32 %v73, 0.70710677
  %v85 = vmul.f32 %v76, 0.70710677
  %v86 = vmul.f32 %v79, 0.70710677
  %v87 = vand.u32 2147483647, %v84
  %v88 = vand.u32 2147483647, %v85
  %v89 = vand.u32 2147483647, %v86
  %v90 = vmul.f32 %v87, 0.3275911
  %v91 = vmul.f32 %v88, 0.3275911
  %v92 = vmul.f32 %v89, 0.3275911
  %v93 = vadd.f32 %v90, 1.0
  %v94 = vadd.f32 %v91, 1.0
  %v95 = vadd.f32 %v92, 1.0
  %v96 = vrcp.pop %v93
  %v97 = vmul.f32 %v93, %v96
  %v98 = vsub.f32 1.0, %v97
  %v99 = vmul.f32 %v96, %v98
  %v100 = vadd.f32 %v96, %v99
  %vm101 = vweird.f32 %v93
  %vm102 = vweird.f32 %v96
  %vm103 = vmor %vm101, %vm102
  %v104 = vsel %vm103, %v96, %v100
  %v105 = vand.u32 2147483647, %v93
  %vm106 = vcmp.eq.f32.partialorder %v105, 8.507059e+37
  %v107 = vand.u32 %v93, 2147483648
  %v108 = vor.u32 1.1754944e-38, %v107
  %v109 = vsel %vm106, %v108, %v104
  %v110 = vmul.f32 1.0, %v109
  %v111 = vrcp.pop %v94
  %v112 = vmul.f32 %v94, %v111
  %v113 = vsub.f32 1.0, %v112
  %v114 = vmul.f32 %v111, %v113
  %v115 = vadd.f32 %v111, %v114
  %vm116 = vweird.f32 %v94
  %vm117 = vweird.f32 %v111
  %vm118 = vmor %vm116, %vm117
  %v119 = vsel %vm118, %v111, %v115
  %v120 = vand.u32 2147483647, %v94
  %vm121 = vcmp.eq.f32.partialorder %v120, 8.507059e+37
  %v122 = vand.u32 %v94, 2147483648
  %v123 = vor.u32 1.1754944e-38, %v122
  %v124 = vsel %vm121, %v123, %v119
  %v125 = vmul.f32 1.0, %v124
  %v126 = vrcp.pop %v95
  %v127 = vmul.f32 %v95, %v126
  %v128 = vsub.f32 1.0, %v127
  %v129 = vmul.f32 %v126, %v128
  %v130 = vadd.f32 %v126, %v129
  %vm131 = vweird.f32 %v95
  %vm132 = vweird.f32 %v126
  %vm133 = vmor %vm131, %vm132
  %v134 = vsel %vm133, %v126, %v130
  %v135 = vand.u32 2147483647, %v95
  %vm136 = vcmp.eq.f32.partialorder %v135, 8.507059e+37
  %v137 = vand.u32 %v95, 2147483648
  %v138 = vor.u32 1.1754944e-38, %v137
  %v139 = vsel %vm136, %v138, %v134
  %v140 = vmul.f32 1.0, %v139
  %v141 = vmul.f32 %v110, 1.0614054
  %v142 = vmul.f32 %v125, 1.0614054
  %v143 = vmul.f32 %v140, 1.0614054
  %v144 = vadd.f32 %v141, -1.4531521
  %v145 = vadd.f32 %v142, -1.4531521
  %v146 = vadd.f32 %v143, -1.4531521
  %v147 = vmul.f32 %v144, %v110
  %v148 = vmul.f32 %v145, %v125
  %v149 = vmul.f32 %v146, %v140
  %v150 = vadd.f32 %v147, 1.4214138
  %v151 = vadd.f32 %v148, 1.4214138
  %v152 = vadd.f32 %v149, 1.4214138
  %v153 = vmul.f32 %v150, %v110
  %v154 = vmul.f32 %v151, %v125
  %v155 = vmul.f32 %v152, %v140
  %v156 = vadd.f32 %v153, -0.28449672
  %v157 = vadd.f32 %v154, -0.28449672
  %v158 = vadd.f32 %v155, -0.28449672
  %v159 = vmul.f32 %v156, %v110
  %v160 = vmul.f32 %v157, %v125
  %v161 = vmul.f32 %v158, %v140
  %v162 = vadd.f32 %v159, 0.2548296
  %v163 = vadd.f32 %v160, 0.2548296
  %v164 = vadd.f32 %v161, 0.2548296
  %v165 = vmul.f32 %v162, %v110
  %v166 = vmul.f32 %v163, %v125
  %v167 = vmul.f32 %v164, %v140
  %v168 = vsub.f32 0.0, %v87
  %v169 = vsub.f32 0.0, %v88
  %v170 = vsub.f32 0.0, %v89
  %v171 = vmul.f32 %v168, %v87
  %v172 = vmul.f32 %v169, %v88
  %v173 = vmul.f32 %v170, %v89
  %v174 = vmul.f32 %v171, 1.442695
  %v175 = vpow.pop %v174
  %v176 = vmul.f32 %v172, 1.442695
  %v177 = vpow.pop %v176
  %v178 = vmul.f32 %v173, 1.442695
  %v179 = vpow.pop %v178
  %v180 = vmul.f32 %v165, %v175
  %v181 = vmul.f32 %v166, %v177
  %v182 = vmul.f32 %v167, %v179
  %v183 = vsub.f32 1.0, %v180
  %v184 = vsub.f32 1.0, %v181
  %v185 = vsub.f32 1.0, %v182
  %vm186 = vcmp.lt.f32.partialorder %v84, 0.0
  %vm187 = vcmp.lt.f32.partialorder %v85, 0.0
  %vm188 = vcmp.lt.f32.partialorder %v86, 0.0
  %v189 = vsub.f32 0.0, %v183
  %v190 = vsub.f32 0.0, %v184
  %v191 = vsub.f32 0.0, %v185
  %v192 = vsel %vm186, %v189, %v183
  %v193 = vsel %vm187, %v190, %v184
  %v194 = vsel %vm188, %v191, %v185
  %v195 = vadd.f32 %v192, 1.0
  %v196 = vadd.f32 %v193, 1.0
  %v197 = vadd.f32 %v194, 1.0
  %v198 = vmul.f32 %v81, %v195
  %v199 = vmul.f32 %v82, %v196
  %v200 = vmul.f32 %v83, %v197
  %v201 = vld [vmem:[#allocation2] sm:$0xff]
  %v202 = vld [vmem:[#allocation2 + $0x8] sm:$0xff]
  %v203 = vld [vmem:[#allocation2 + $0x10] sm:$0xff]
  %v204 = vld [vmem:[%s3] sm:$0xff]
  %v205 = vld [vmem:[%s3 + $0x8] sm:$0xff]
  %v206 = vld [vmem:[%s3 + $0x10] sm:$0xff]
  %v207 = vld [vmem:[%s3 + $0x18] sm:$0xff]
  %v208 = vld [vmem:[%s3 + $0x20] sm:$0xff]
  %v209 = vld [vmem:[%s3 + $0x28] sm:$0xff]
  %v210 = vld [vmem:[%s3 + $0x30] sm:$0xff]
  %v211 = vld [vmem:[%s3 + $0x38] sm:$0xff]
  %v212 = vld [vmem:[%s3 + $0x40] sm:$0xff]
  %v213 = vld [vmem:[%s3 + $0x48] sm:$0xff]
  %v214 = vld [vmem:[%s3 + $0x50] sm:$0xff]
  %v215 = vld [vmem:[%s3 + $0x58] sm:$0xff]
  %v216 = vld [vmem:[%s3 + $0x60] sm:$0xff]
  %v217 = vld [vmem:[%s3 + $0x68] sm:$0xff]
  %v218 = vld [vmem:[%s3 + $0x70] sm:$0xff]
  %v219 = vld [vmem:[%s3 + $0x78] sm:$0xff]
  %220 = vmatpush.msra.mxu0 %v219
  %221 = vmatpush.msra.mxu0 %v218
  %222 = vmatpush.msra.mxu0 %v217
  %223 = vmatpush.msra.mxu0 %v216
  %224 = vmatpush.msra.mxu0 %v215
  %225 = vmatpush.msra.mxu0 %v214
  %226 = vmatpush.msra.mxu0 %v213
  %227 = vmatpush.msra.mxu0 %v212
  %228 = vmatpush.msra.mxu0 %v211
  %229 = vmatpush.msra.mxu0 %v210
  %230 = vmatpush.msra.mxu0 %v209
  %231 = vmatpush.msra.mxu0 %v208
  %232 = vmatpush.msra.mxu0 %v207
  %233 = vmatpush.msra.mxu0 %v206
  %234 = vmatpush.msra.mxu0 %v205
  %235 = vmatpush.msra.mxu0 %v204
  %236 = vmatmul.f32.gmra.mxu0 %v198
  %v237 = vpop.f32.mrf.mxu0
  %v238 = vadd.f32 0.0, %v237
  %239 = vmatmul.f32.gmra.mxu0 %v199
  %v240 = vpop.f32.mrf.mxu0
  %v241 = vadd.f32 0.0, %v240
  %242 = vmatmul.f32.gmra.mxu0 %v200
  %v243 = vpop.f32.mrf.mxu0
  %v244 = vadd.f32 0.0, %v243
  %245 = vdwg.mxu0
  %v246 = vadd.f32 %v201, %v238
  %v247 = vadd.f32 %v202, %v241
  %v248 = vadd.f32 %v203, %v244
  %249 = vst.msk [vmem:[#allocation2] sm:$0xff] %vm45, %v246
  %250 = vst.msk [vmem:[#allocation2 + $0x8] sm:$0xff] %vm45, %v247
  %251 = vst.msk [vmem:[#allocation2 + $0x10] sm:$0xff] %vm45, %v248
  // Predicated region
  $region34: #{clibert_forward.8} parent=0 // pred_check
    %p252 = pneg %p26
  $region35: #{clibert_forward.8} parent=0 // pred_check_branch
    %254 = sbr.rel (%p252) target = $region37
  $region36: #{clibert_forward.8} parent=0 // pred_region
    %v255 = vld [vmem:[#allocation2] sm:$0xff]
    %v256 = vld [vmem:[#allocation2 + $0x8] sm:$0xff]
    %v257 = vld [vmem:[#allocation2 + $0x10] sm:$0xff]
    %v258 = vld [vmem:[%s4] sm:$0x1]
    %v260 = vperm.slane %v258, 0
    %v262 = vadd.f32 %v255, %v260
    %v263 = vadd.f32 %v256, %v260
    %v264 = vadd.f32 %v257, %v260
    %v265 = vadd.f32 %v262, %v34
    %v266 = vadd.f32 %v263, %v35
    %v267 = vadd.f32 %v264, %v36
    %v268 = vld [vmem:[%s5] sm:$0x1]
    %v269 = vld [vmem:[%s6] sm:$0x1]
    %v270 = vsel %vm45, %v265, 0.0
    %271 = vadd.xlane.f32.xlu0 %v270
    %v272 = vpop.xlane.xlu0 %271
    %v273 = vsel %vm45, %v266, 0.0
    %274 = vadd.xlane.f32.xlu0 %v273
    %v275 = vpop.xlane.xlu0 %274
    %v276 = vsel %vm45, %v267, 0.0
    %277 = vadd.xlane.f32.xlu0 %v276
    %v278 = vpop.xlane.xlu0 %277
    %v279 = vrcp.pop 32.0
    %v280 = vmul.f32 32.0, %v279
    %v281 = vsub.f32 1.0, %v280
    %v282 = vmul.f32 %v279, %v281
    %v283 = vadd.f32 %v279, %v282
    %vm284 = vweird.f32 %v279
    %v285 = vsel %vm284, %v279, %v283
    %v286 = vmul.f32 %v272, %v285
    %v287 = vmul.f32 %v275, %v285
    %v288 = vmul.f32 %v278, %v285
    %v289 = vsub.f32 %v265, %v286
    %v290 = vsub.f32 %v266, %v287
    %v291 = vsub.f32 %v267, %v288
    %v292 = vmul.f32 %v289, %v289
    %v293 = vmul.f32 %v290, %v290
    %v294 = vmul.f32 %v291, %v291
    %v295 = vsel %vm45, %v292, 0.0
    %296 = vadd.xlane.f32.xlu0 %v295
    %v297 = vpop.xlane.xlu0 %296
    %v298 = vsel %vm45, %v293, 0.0
    %299 = vadd.xlane.f32.xlu0 %v298
    %v300 = vpop.xlane.xlu0 %299
    %v301 = vsel %vm45, %v294, 0.0
    %302 = vadd.xlane.f32.xlu0 %v301
    %v303 = vpop.xlane.xlu0 %302
    %v304 = vmul.f32 %v297, %v285
    %v305 = vmul.f32 %v300, %v285
    %v306 = vmul.f32 %v303, %v285
    %v307 = vadd.f32 %v304, 1e-05
    %v308 = vadd.f32 %v305, 1e-05
    %v309 = vadd.f32 %v306, 1e-05
    %v310 = vrsqrt.pop %v307
    %v311 = vmul.f32 %v310, %v307
    %v312 = vmul.f32 %v311, %v310
    %v313 = vmul.f32 0.5, %v312
    %v314 = vsub.f32 1.5, %v313
    %v315 = vmul.f32 %v310, %v314
    %vm316 = vweird.f32 %v307
    %vm317 = vweird.f32 %v310
    %vm318 = vmor %vm316, %vm317
    %v319 = vsel %vm318, %v310, %v315
    %v320 = vrsqrt.pop %v308
    %v321 = vmul.f32 %v320, %v308
    %v322 = vmul.f32 %v321, %v320
    %v323 = vmul.f32 0.5, %v322
    %v324 = vsub.f32 1.5, %v323
    %v325 = vmul.f32 %v320, %v324
    %vm326 = vweird.f32 %v308
    %vm327 = vweird.f32 %v320
    %vm328 = vmor %vm326, %vm327
    %v329 = vsel %vm328, %v320, %v325
    %v330 = vrsqrt.pop %v309
    %v331 = vmul.f32 %v330, %v309
    %v332 = vmul.f32 %v331, %v330
    %v333 = vmul.f32 0.5, %v332
    %v334 = vsub.f32 1.5, %v333
    %v335 = vmul.f32 %v330, %v334
    %vm336 = vweird.f32 %v309
    %vm337 = vweird.f32 %v330
    %vm338 = vmor %vm336, %vm337
    %v339 = vsel %vm338, %v330, %v335
    %v340 = vmul.f32 %v289, %v319
    %v341 = vmul.f32 %v290, %v329
    %v342 = vmul.f32 %v291, %v339
    %v344 = vperm.slane %v268, 0
    %v346 = vmul.f32 %v340, %v344
    %v347 = vmul.f32 %v341, %v344
    %v348 = vmul.f32 %v342, %v344
    %v350 = vperm.slane %v269, 0
    %v352 = vadd.f32 %v346, %v350
    %v353 = vadd.f32 %v347, %v350
    %v354 = vadd.f32 %v348, %v350
    %355 = vst.msk [vmem:[%s7] sm:$0xff] %vm45, %v352
    %356 = vst.msk [vmem:[%s7 + $0x8] sm:$0xff] %vm45, %v353
    %357 = vst.msk [vmem:[%s7 + $0x10] sm:$0xff] %vm45, %v354
  $region37: #{clibert_forward.8} parent=0 // pred_fallthru
    _
  // Predicated region
  $region38: #{clibert_forward.8} parent=0 // pred_check
    _
  $region39: #{clibert_forward.8} parent=0 // pred_check_branch
    %359 = sbr.rel (0) target = $region41
  $region40: #{clibert_forward.8} parent=0 // pred_region
    _
  $region41: #{clibert_forward.8} parent=0 // pred_fallthru
    _
  // Predicated region
  $region42: #{clibert_forward.8} parent=0 // pred_check
    _
  $region43: #{clibert_forward.8} parent=0 // pred_check_branch
    %361 = sbr.rel (0) target = $region45
  $region44: #{clibert_forward.8} parent=0 // pred_region
    _
  $region45: #{clibert_forward.8} parent=0 // pred_fallthru
    _

// kernel: clibert_forward.7
$region0: #{clibert_forward.7}
  #allocation0 [shape = 'u32[]', space=smem, size = 0x4, offset = 0x4, fixed_abs, tag = 'smem constant byte address 0x4 - core index']
  #allocation1 [shape = 'u32[72,128]{1,0:T(1,128)}', space=vmem, size = 0x9000, scoped, tag = 'internal scratch']
  #allocation2 [shape = 'f32[12,32]{1,0:T(8,128)}', space=vmem, size = 0x2000, scoped, tag = 'scratch operand']
  %s0 = inlined_call_operand.vmem [shape: f32[2,12,32], index: 0, kind: input, shape index: {}, may-alias: {0,1}]
  %s1 = inlined_call_operand.vmem [shape: f32[2,12,32], index: 1, kind: input, shape index: {}, may-alias: {0,1}]
  %s2 = inlined_call_operand.vmem [shape: f32[4,32,8], index: 2, kind: input, shape index: {}]
  %s3 = inlined_call_operand.vmem [shape: f32[4,1,8], index: 3, kind: input, shape index: {}]
  %s4 = inlined_call_operand.vmem [shape: f32[4,32,8], index: 4, kind: input, shape index: {}]
  %s5 = inlined_call_operand.vmem [shape: f32[4,1,8], index: 5, kind: input, shape index: {}]
  %s6 = inlined_call_operand.vmem [shape: f32[4,32,8], index: 6, kind: input, shape index: {}]
  %s7 = inlined_call_operand.vmem [shape: f32[4,1,8], index: 7, kind: input, shape index: {}]
  %s8 = inlined_call_operand.vmem [shape: f32[4,8,32], index: 8, kind: input, shape index: {}]
  %s9 = inlined_call_operand.vmem [shape: f32[1,32], index: 9, kind: input, shape index: {}]
  %s10 = inlined_call_operand.vmem [shape: f32[1,32], index: 10, kind: input, shape index: {}]
  %s11 = inlined_call_operand.vmem [shape: f32[1,32], index: 11, kind: input, shape index: {}]
  %s12 = inlined_call_operand.vmem [shape: f32[2,12,32], index: 12, kind: output, shape index: {}]
  %s13 = sld [smem:[#allocation0]]
  $region89: #{clibert_forward.7} parent=0
    _
  %s15 = ssub.s32 1, %s13
  %s16 = scalar_select 0, %s15, %s13
  loop: start=0, step=1, limit=10
  $region2: #{clibert_forward.7} parent=0 // loop_pre_header
    _
  $region3: #{clibert_forward.7} parent=0 // loop_header
    %s18 = sphi 0, %s22
    %p19 = scmp.ge.s32.totalorder %s18, 10
    %s25 = sphi 0, %s44
    %s26 = sphi 0, %s40
    %s27 = sphi 0, %s36
    %s28 = sphi 0, %s25
    %s29 = sphi 0, %s26
    %s30 = sphi 0, %s27
    %s31 = sphi 0, %s28
    %s32 = sphi 0, %s29
    %s33 = sphi 0, %s30
    %s49 = sphi 0, %s51
    %s52 = sphi 0, %s49
    %s53 = sphi 0, %s52
    %s69 = sphi 0, %s53
    %s75 = sphi 0, %s77
    %s78 = sphi 0, %s75
    %s79 = sphi 0, %s78
    %s95 = sphi 0, %s79
    %s101 = sphi 0, %s103
    %s104 = sphi 0, %s101
    %s105 = sphi 0, %s104
    %s121 = sphi 0, %s105
    %s127 = sphi 0, %s129
    %s130 = sphi 0, %s127
    %s131 = sphi 0, %s130
    %s147 = sphi 0, %s131
    %s153 = sphi 0, %s155
    %s156 = sphi 0, %s153
    %s157 = sphi 0, %s156
    %s173 = sphi 0, %s157
    %s179 = sphi 0, %s181
    %s182 = sphi 0, %s179
    %s183 = sphi 0, %s182
    %s199 = sphi 0, %s183
    %s205 = sphi 0, %s207
    %s208 = sphi 0, %s205
    %s209 = sphi 0, %s208
    %s225 = sphi 0, %s209
    %s231 = sphi 0, %s233
    %s234 = sphi 0, %s231
    %s235 = sphi 0, %s234
    %s251 = sphi 0, %s235
    %s257 = sphi 0, %s259
    %s260 = sphi 0, %s257
    %s261 = sphi 0, %s260
    %s277 = sphi 0, %s261
    %s281 = sphi 0, %s281
    %s283 = sphi 0, %s281
    %s284 = sphi 0, %s283
    %s298 = sphi 0, %s284
    %s302 = sphi 0, %s302
    %s304 = sphi 0, %s302
    %s305 = sphi 0, %s304
    %s319 = sphi 0, %s305
    %s323 = sphi 0, %s323
    %s325 = sphi 0, %s323
    %s326 = sphi 0, %s325
    %s340 = sphi 0, %s326
    %s348 = sphi 0, %s350
    %s351 = sphi 0, %s348
    %s352 = sphi 0, %s351
    %s368 = sphi 0, %s352
  $region4: #{clibert_forward.7} parent=0 // loop_header_branch
    %21 = sbr.rel (%p19) target = $region8
  $region5: #{clibert_forward.7} parent=0 // loop_body
    %s23 = ssub.s32 %s18, 1
    %s24 = ssub.s32 %s18, 2
    %s34 = sadd.s32 1, %s27
    %p35 = scmp.ge.s32.totalorder %s34, 4
    %s36 = scalar_select %p35, 0, %s34
    %s37 = sadd.s32 1, %s26
    %s38 = scalar_select %p35, %s37, %s26
    %p39 = scmp.ge.s32.totalorder %s38, 1
    %s40 = scalar_select %p39, 0, %s38
    %s41 = sadd.s32 1, %s25
    %s42 = scalar_select %p39, %s41, %s25
    %p43 = scmp.ge.s32.totalorder %s42, 2
    %s44 = scalar_select %p43, 0, %s42
    %s45 = ssub.s32 %s25, %s44
    %s46 = ssub.s32 %s26, %s40
    %s47 = sor.u32 %s45, %s46
    %p48 = scmp.eq.s32.totalorder %s47, 0
    %s50 = sadd.s32 %s49, 1
    %s51 = scalar_select %p48, %s49, %s50
    %p54 = pneg %p48
    %p55 = scmp.eq.s32.totalorder %s18, 7
    %p56 = por %p54, %p55
    %p57 = scmp.ne.s32.totalorder %s49, %s52
    %p58 = scmp.eq.s32.totalorder %s18, 0
    %p59 = por %p57, %p58
    %p60 = scmp.ne.s32.totalorder %s49, %s52
    %p61 = scmp.eq.s32.totalorder %s23, 7
    %p62 = por %p60, %p61
    %p63 = scmp.ne.s32.totalorder %s52, %s53
    %p64 = scmp.eq.s32.totalorder %s23, 0
    %p65 = por %p63, %p64
    %p66 = scmp.ne.s32.totalorder %s52, %s53
    %p67 = scmp.eq.s32.totalorder %s24, 7
    %p68 = por %p66, %p67
    %p70 = scmp.ne.s32.totalorder %s53, %s69
    %p71 = scmp.eq.s32.totalorder %s24, 0
    %p72 = por %p70, %p71
    %s73 = ssub.s32 %s25, %s44
    %p74 = scmp.eq.s32.totalorder %s73, 0
    %s76 = sadd.s32 %s75, 1
    %s77 = scalar_select %p74, %s75, %s76
    %p80 = pneg %p74
    %p81 = scmp.eq.s32.totalorder %s18, 7
    %p82 = por %p80, %p81
    %p83 = scmp.ne.s32.totalorder %s75, %s78
    %p84 = scmp.eq.s32.totalorder %s18, 0
    %p85 = por %p83, %p84
    %p86 = scmp.ne.s32.totalorder %s75, %s78
    %p87 = scmp.eq.s32.totalorder %s23, 7
    %p88 = por %p86, %p87
    %p89 = scmp.ne.s32.totalorder %s78, %s79
    %p90 = scmp.eq.s32.totalorder %s23, 0
    %p91 = por %p89, %p90
    %p92 = scmp.ne.s32.totalorder %s78, %s79
    %p93 = scmp.eq.s32.totalorder %s24, 7
    %p94 = por %p92, %p93
    %p96 = scmp.ne.s32.totalorder %s79, %s95
    %p97 = scmp.eq.s32.totalorder %s24, 0
    %p98 = por %p96, %p97
    %s99 = ssub.s32 %s27, %s36
    %p100 = scmp.eq.s32.totalorder %s99, 0
    %s102 = sadd.s32 %s101, 1
    %s103 = scalar_select %p100, %s101, %s102
    %p106 = pneg %p100
    %p107 = scmp.eq.s32.totalorder %s18, 7
    %p108 = por %p106, %p107
    %p109 = scmp.ne.s32.totalorder %s101, %s104
    %p110 = scmp.eq.s32.totalorder %s18, 0
    %p111 = por %p109, %p110
    %p112 = scmp.ne.s32.totalorder %s101, %s104
    %p113 = scmp.eq.s32.totalorder %s23, 7
    %p114 = por %p112, %p113
    %p115 = scmp.ne.s32.totalorder %s104, %s105
    %p116 = scmp.eq.s32.totalorder %s23, 0
    %p117 = por %p115, %p116
    %p118 = scmp.ne.s32.totalorder %s104, %s105
    %p119 = scmp.eq.s32.totalorder %s24, 7
    %p120 = por %p118, %p119
    %p122 = scmp.ne.s32.totalorder %s105, %s121
    %p123 = scmp.eq.s32.totalorder %s24, 0
    %p124 = por %p122, %p123
    %s125 = ssub.s32 %s27, %s36
    %p126 = scmp.eq.s32.totalorder %s125, 0
    %s128 = sadd.s32 %s127, 1
    %s129 = scalar_select %p126, %s127, %s128
    %p132 = pneg %p126
    %p133 = scmp.eq.s32.totalorder %s18, 7
    %p134 = por %p132, %p133
    %p135 = scmp.ne.s32.totalorder %s127, %s130
    %p136 = scmp.eq.s32.totalorder %s18, 0
    %p137 = por %p135, %p136
    %p138 = scmp.ne.s32.totalorder %s127, %s130
    %p139 = scmp.eq.s32.totalorder %s23, 7
    %p140 = por %p138, %p139
    %p141 = scmp.ne.s32.totalorder %s130, %s131
    %p142 = scmp.eq.s32.totalorder %s23, 0
    %p143 = por %p141, %p142
    %p144 = scmp.ne.s32.totalorder %s130, %s131
    %p145 = scmp.eq.s32.totalorder %s24, 7
    %p146 = por %p144, %p145
    %p148 = scmp.ne.s32.totalorder %s131, %s147
    %p149 = scmp.eq.s32.totalorder %s24, 0
    %p150 = por %p148, %p149
    %s151 = ssub.s32 %s27, %s36
    %p152 = scmp.eq.s32.totalorder %s151, 0
    %s154 = sadd.s32 %s153, 1
    %s155 = scalar_select %p152, %s153, %s154
    %p158 = pneg %p152
    %p159 = scmp.eq.s32.totalorder %s18, 7
    %p160 = por %p158, %p159
    %p161 = scmp.ne.s32.totalorder %s153, %s156
    %p162 = scmp.eq.s32.totalorder %s18, 0
    %p163 = por %p161, %p162
    %p164 = scmp.ne.s32.totalorder %s153, %s156
    %p165 = scmp.eq.s32.totalorder %s23, 7
    %p166 = por %p164, %p165
    %p167 = scmp.ne.s32.totalorder %s156, %s157
    %p168 = scmp.eq.s32.totalorder %s23, 0
    %p169 = por %p167, %p168
    %p170 = scmp.ne.s32.totalorder %s156, %s157
    %p171 = scmp.eq.s32.totalorder %s24, 7
    %p172 = por %p170, %p171
    %p174 = scmp.ne.s32.totalorder %s157, %s173
    %p175 = scmp.eq.s32.totalorder %s24, 0
    %p176 = por %p174, %p175
    %s177 = ssub.s32 %s27, %s36
    %p178 = scmp.eq.s32.totalorder %s177, 0
    %s180 = sadd.s32 %s179, 1
    %s181 = scalar_select %p178, %s179, %s180
    %p184 = pneg %p178
    %p185 = scmp.eq.s32.totalorder %s18, 7
    %p186 = por %p184, %p185
    %p187 = scmp.ne.s32.totalorder %s179, %s182
    %p188 = scmp.eq.s32.totalorder %s18, 0
    %p189 = por %p187, %p188
    %p190 = scmp.ne.s32.totalorder %s179, %s182
    %p191 = scmp.eq.s32.totalorder %s23, 7
    %p192 = por %p190, %p191
    %p193 = scmp.ne.s32.totalorder %s182, %s183
    %p194 = scmp.eq.s32.totalorder %s23, 0
    %p195 = por %p193, %p194
    %p196 = scmp.ne.s32.totalorder %s182, %s183
    %p197 = scmp.eq.s32.totalorder %s24, 7
    %p198 = por %p196, %p197
    %p200 = scmp.ne.s32.totalorder %s183, %s199
    %p201 = scmp.eq.s32.totalorder %s24, 0
    %p202 = por %p200, %p201
    %s203 = ssub.s32 %s27, %s36
    %p204 = scmp.eq.s32.totalorder %s203, 0
    %s206 = sadd.s32 %s205, 1
    %s207 = scalar_select %p204, %s205, %s206
    %p210 = pneg %p204
    %p211 = scmp.eq.s32.totalorder %s18, 7
    %p212 = por %p210, %p211
    %p213 = scmp.ne.s32.totalorder %s205, %s208
    %p214 = scmp.eq.s32.totalorder %s18, 0
    %p215 = por %p213, %p214
    %p216 = scmp.ne.s32.totalorder %s205, %s208
    %p217 = scmp.eq.s32.totalorder %s23, 7
    %p218 = por %p216, %p217
    %p219 = scmp.ne.s32.totalorder %s208, %s209
    %p220 = scmp.eq.s32.totalorder %s23, 0
    %p221 = por %p219, %p220
    %p222 = scmp.ne.s32.totalorder %s208, %s209
    %p223 = scmp.eq.s32.totalorder %s24, 7
    %p224 = por %p222, %p223
    %p226 = scmp.ne.s32.totalorder %s209, %s225
    %p227 = scmp.eq.s32.totalorder %s24, 0
    %p228 = por %p226, %p227
    %s229 = ssub.s32 %s27, %s36
    %p230 = scmp.eq.s32.totalorder %s229, 0
    %s232 = sadd.s32 %s231, 1
    %s233 = scalar_select %p230, %s231, %s232
    %p236 = pneg %p230
    %p237 = scmp.eq.s32.totalorder %s18, 7
    %p238 = por %p236, %p237
    %p239 = scmp.ne.s32.totalorder %s231, %s234
    %p240 = scmp.eq.s32.totalorder %s18, 0
    %p241 = por %p239, %p240
    %p242 = scmp.ne.s32.totalorder %s231, %s234
    %p243 = scmp.eq.s32.totalorder %s23, 7
    %p244 = por %p242, %p243
    %p245 = scmp.ne.s32.totalorder %s234, %s235
    %p246 = scmp.eq.s32.totalorder %s23, 0
    %p247 = por %p245, %p246
    %p248 = scmp.ne.s32.totalorder %s234, %s235
    %p249 = scmp.eq.s32.totalorder %s24, 7
    %p250 = por %p248, %p249
    %p252 = scmp.ne.s32.totalorder %s235, %s251
    %p253 = scmp.eq.s32.totalorder %s24, 0
    %p254 = por %p252, %p253
    %s255 = ssub.s32 %s27, %s36
    %p256 = scmp.eq.s32.totalorder %s255, 0
    %s258 = sadd.s32 %s257, 1
    %s259 = scalar_select %p256, %s257, %s258
    %p262 = pneg %p256
    %p263 = scmp.eq.s32.totalorder %s18, 7
    %p264 = por %p262, %p263
    %p265 = scmp.ne.s32.totalorder %s257, %s260
    %p266 = scmp.eq.s32.totalorder %s18, 0
    %p267 = por %p265, %p266
    %p268 = scmp.ne.s32.totalorder %s257, %s260
    %p269 = scmp.eq.s32.totalorder %s23, 7
    %p270 = por %p268, %p269
    %p271 = scmp.ne.s32.totalorder %s260, %s261
    %p272 = scmp.eq.s32.totalorder %s23, 0
    %p273 = por %p271, %p272
    %p274 = scmp.ne.s32.totalorder %s260, %s261
    %p275 = scmp.eq.s32.totalorder %s24, 7
    %p276 = por %p274, %p275
    %p278 = scmp.ne.s32.totalorder %s261, %s277
    %p279 = scmp.eq.s32.totalorder %s24, 0
    %p280 = por %p278, %p279
    %s282 = sadd.s32 %s281, 1
    %p285 = scmp.eq.s32.totalorder %s18, 7
    %p286 = scmp.ne.s32.totalorder %s281, %s283
    %p287 = scmp.eq.s32.totalorder %s18, 0
    %p288 = por %p286, %p287
    %p289 = scmp.ne.s32.totalorder %s281, %s283
    %p290 = scmp.eq.s32.totalorder %s23, 7
    %p291 = por %p289, %p290
    %p292 = scmp.ne.s32.totalorder %s283, %s284
    %p293 = scmp.eq.s32.totalorder %s23, 0
    %p294 = por %p292, %p293
    %p295 = scmp.ne.s32.totalorder %s283, %s284
    %p296 = scmp.eq.s32.totalorder %s24, 7
    %p297 = por %p295, %p296
    %p299 = scmp.ne.s32.totalorder %s284, %s298
    %p300 = scmp.eq.s32.totalorder %s24, 0
    %p301 = por %p299, %p300
    %s303 = sadd.s32 %s302, 1
    %p306 = scmp.eq.s32.totalorder %s18, 7
    %p307 = scmp.ne.s32.totalorder %s302, %s304
    %p308 = scmp.eq.s32.totalorder %s18, 0
    %p309 = por %p307, %p308
    %p310 = scmp.ne.s32.totalorder %s302, %s304
    %p311 = scmp.eq.s32.totalorder %s23, 7
    %p312 = por %p310, %p311
    %p313 = scmp.ne.s32.totalorder %s304, %s305
    %p314 = scmp.eq.s32.totalorder %s23, 0
    %p315 = por %p313, %p314
    %p316 = scmp.ne.s32.totalorder %s304, %s305
    %p317 = scmp.eq.s32.totalorder %s24, 7
    %p318 = por %p316, %p317
    %p320 = scmp.ne.s32.totalorder %s305, %s319
    %p321 = scmp.eq.s32.totalorder %s24, 0
    %p322 = por %p320, %p321
    %s324 = sadd.s32 %s323, 1
    %p327 = scmp.eq.s32.totalorder %s18, 7
    %p328 = scmp.ne.s32.totalorder %s323, %s325
    %p329 = scmp.eq.s32.totalorder %s18, 0
    %p330 = por %p328, %p329
    %p331 = scmp.ne.s32.totalorder %s323, %s325
    %p332 = scmp.eq.s32.totalorder %s23, 7
    %p333 = por %p331, %p332
    %p334 = scmp.ne.s32.totalorder %s325, %s326
    %p335 = scmp.eq.s32.totalorder %s23, 0
    %p336 = por %p334, %p335
    %p337 = scmp.ne.s32.totalorder %s325, %s326
    %p338 = scmp.eq.s32.totalorder %s24, 7
    %p339 = por %p337, %p338
    %p341 = scmp.ne.s32.totalorder %s326, %s340
    %p342 = scmp.eq.s32.totalorder %s24, 0
    %p343 = por %p341, %p342
    %s344 = ssub.s32 %s25, %s44
    %s345 = ssub.s32 %s26, %s40
    %s346 = sor.u32 %s344, %s345
    %p347 = scmp.eq.s32.totalorder %s346, 0
    %s349 = sadd.s32 %s348, 1
    %s350 = scalar_select %p347, %s348, %s349
    %p353 = pneg %p347
    %p354 = scmp.eq.s32.totalorder %s18, 7
    %p355 = por %p353, %p354
    %p356 = scmp.ne.s32.totalorder %s348, %s351
    %p357 = scmp.eq.s32.totalorder %s18, 0
    %p358 = por %p356, %p357
    %p359 = scmp.ne.s32.totalorder %s348, %s351
    %p360 = scmp.eq.s32.totalorder %s23, 7
    %p361 = por %p359, %p360
    %p362 = scmp.ne.s32.totalorder %s351, %s352
    %p363 = scmp.eq.s32.totalorder %s23, 0
    %p364 = por %p362, %p363
    %p365 = scmp.ne.s32.totalorder %s351, %s352
    %p366 = scmp.eq.s32.totalorder %s24, 7
    %p367 = por %p365, %p366
    %p369 = scmp.ne.s32.totalorder %s352, %s368
    %p370 = scmp.eq.s32.totalorder %s24, 0
    %p371 = por %p369, %p370
    %p372 = scmp.le.s32.totalorder 1, %s18
    %p373 = scmp.lt.s32.totalorder %s18, 9
    %p374 = pnand %p372, %p373
    %p375 = pneg %p374
    // Predicated region
    $region9: #{clibert_forward.7} parent=5 // pred_check
      _
    $region10: #{clibert_forward.7} parent=5 // pred_check_branch
      %377 = sbr.rel (%p374) target = $region12
    $region11: #{clibert_forward.7} parent=5 // pred_region
      %s378 = ssub.s32 %s18, 1
      // Predicated region
      $region13: #{clibert_forward.7} parent=11 // pred_check
        %p379 = pneg %p294
      $region14: #{clibert_forward.7} parent=11 // pred_check_branch
        %381 = sbr.rel (%p379) target = $region16
      $region15: #{clibert_forward.7} parent=11 // pred_region
        _
      $region16: #{clibert_forward.7} parent=11 // pred_fallthru
        _
      // Predicated region
      $region17: #{clibert_forward.7} parent=11 // pred_check
        %p382 = pneg %p315
      $region18: #{clibert_forward.7} parent=11 // pred_check_branch
        %384 = sbr.rel (%p382) target = $region20
      $region19: #{clibert_forward.7} parent=11 // pred_region
        _
      $region20: #{clibert_forward.7} parent=11 // pred_fallthru
        _
      // Predicated region
      $region21: #{clibert_forward.7} parent=11 // pred_check
        %p385 = pneg %p336
      $region22: #{clibert_forward.7} parent=11 // pred_check_branch
        %387 = sbr.rel (%p385) target = $region24
      $region23: #{clibert_forward.7} parent=11 // pred_region
        _
      $region24: #{clibert_forward.7} parent=11 // pred_fallthru
        _
    $region12: #{clibert_forward.7} parent=5 // pred_fallthru
      _
    %p388 = scmp.lt.s32.totalorder %s18, 8
    // Predicated region
    $region25: #{clibert_forward.7} parent=5 // pred_check
      %p389 = pneg %p388
    $region26: #{clibert_forward.7} parent=5 // pred_check_branch
      %391 = sbr.rel (%p389) target = $region28
    $region27: #{clibert_forward.7} parent=5 // pred_region
      // Predicated region
      $region29: #{clibert_forward.7} parent=27 // pred_check
        %p392 = pneg %p59
      $region30: #{clibert_forward.7} parent=27 // pred_check_branch
        %394 = sbr.rel (%p392) target = $region32
      $region31: #{clibert_forward.7} parent=27 // pred_region
        %s395 = smul.u32 2, %s26
        %p396 = scmp.lt.s32.totalorder %s25, 1
        %s397 = scalar_select %p396, %s25, 1
        %p398 = scmp.lt.s32.totalorder %s395, 1
        %s399 = scalar_select %p398, %s395, 1
        %s400 = smul.addr %s397, 2
        %s401 = sadd.s32 %s399, %s400
        %s402 = smul.addr %s401, 8
        %s403 = scalar_lea.vmem %s0, %s402
        %s404 = smul.u32 2, %s26
      $region32: #{clibert_forward.7} parent=27 // pred_fallthru
        _
      // Predicated region
      $region33: #{clibert_forward.7} parent=27 // pred_check
        %p405 = pneg %p85
      $region34: #{clibert_forward.7} parent=27 // pred_check_branch
        %407 = sbr.rel (%p405) target = $region36
      $region35: #{clibert_forward.7} parent=27 // pred_region
        %p408 = scmp.lt.s32.totalorder %s25, 1
        %s409 = scalar_select %p408, %s25, 1
        %s410 = smul.addr %s409, 2
        %s411 = smul.addr %s410, 8
        %s412 = scalar_lea.vmem %s1, %s411
      $region36: #{clibert_forward.7} parent=27 // pred_fallthru
        _
      // Predicated region
      $region37: #{clibert_forward.7} parent=27 // pred_check
        %p413 = pneg %p111
      $region38: #{clibert_forward.7} parent=27 // pred_check_branch
        %415 = sbr.rel (%p413) target = $region40
      $region39: #{clibert_forward.7} parent=27 // pred_region
        %p416 = scmp.lt.s32.totalorder %s27, 3
        %s417 = scalar_select %p416, %s27, 3
        %s418 = smul.addr %s417, 4
        %s419 = smul.addr %s418, 8
        %s420 = scalar_lea.vmem %s2, %s419
      $region40: #{clibert_forward.7} parent=27 // pred_fallthru
        _
      // Predicated region
      $region41: #{clibert_forward.7} parent=27 // pred_check
        %p421 = pneg %p137
      $region42: #{clibert_forward.7} parent=27 // pred_check_branch
        %423 = sbr.rel (%p421) target = $region44
      $region43: #{clibert_forward.7} parent=27 // pred_region
        %p424 = scmp.lt.s32.totalorder %s27, 3
        %s425 = scalar_select %p424, %s27, 3
        %s426 = scalar_lea.vmem %s3, %s425
      $region44: #{clibert_forward.7} parent=27 // pred_fallthru
        _
      // Predicated region
      $region45: #{clibert_forward.7} parent=27 // pred_check
        %p427 = pneg %p163
      $region46: #{clibert_forward.7} parent=27 // pred_check_branch
        %429 = sbr.rel (%p427) target = $region48
      $region47: #{clibert_forward.7} parent=27 // pred_region
        %p430 = scmp.lt.s32.totalorder %s27, 3
        %s431 = scalar_select %p430, %s27, 3
        %s432 = smul.addr %s431, 4
        %s433 = smul.addr %s432, 8
        %s434 = scalar_lea.vmem %s4, %s433
      $region48: #{clibert_forward.7} parent=27 // pred_fallthru
        _
      // Predicated region
      $region49: #{clibert_forward.7} parent=27 // pred_check
        %p435 = pneg %p189
      $region50: #{clibert_forward.7} parent=27 // pred_check_branch
        %437 = sbr.rel (%p435) target = $region52
      $region51: #{clibert_forward.7} parent=27 // pred_region
        %p438 = scmp.lt.s32.totalorder %s27, 3
        %s439 = scalar_select %p438, %s27, 3
        %s440 = scalar_lea.vmem %s5, %s439
      $region52: #{clibert_forward.7} parent=27 // pred_fallthru
        _
      // Predicated region
      $region53: #{clibert_forward.7} parent=27 // pred_check
        %p441 = pneg %p215
      $region54: #{clibert_forward.7} parent=27 // pred_check_branch
        %443 = sbr.rel (%p441) target = $region56
      $region55: #{clibert_forward.7} parent=27 // pred_region
        %p444 = scmp.lt.s32.totalorder %s27, 3
        %s445 = scalar_select %p444, %s27, 3
        %s446 = smul.addr %s445, 4
        %s447 = smul.addr %s446, 8
        %s448 = scalar_lea.vmem %s6, %s447
      $region56: #{clibert_forward.7} parent=27 // pred_fallthru
        _
      // Predicated region
      $region57: #{clibert_forward.7} parent=27 // pred_check
        %p449 = pneg %p241
      $region58: #{clibert_forward.7} parent=27 // pred_check_branch
        %451 = sbr.rel (%p449) target = $region60
      $region59: #{clibert_forward.7} parent=27 // pred_region
        %p452 = scmp.lt.s32.totalorder %s27, 3
        %s453 = scalar_select %p452, %s27, 3
        %s454 = scalar_lea.vmem %s7, %s453
      $region60: #{clibert_forward.7} parent=27 // pred_fallthru
        _
      // Predicated region
      $region61: #{clibert_forward.7} parent=27 // pred_check
        %p455 = pneg %p267
      $region62: #{clibert_forward.7} parent=27 // pred_check_branch
        %457 = sbr.rel (%p455) target = $region64
      $region63: #{clibert_forward.7} parent=27 // pred_region
        %p458 = scmp.lt.s32.totalorder %s27, 3
        %s459 = scalar_select %p458, %s27, 3
        %s460 = smul.addr %s459, 8
        %s461 = scalar_lea.vmem %s8, %s460
      $region64: #{clibert_forward.7} parent=27 // pred_fallthru
        _
    $region28: #{clibert_forward.7} parent=5 // pred_fallthru
      _
    %p462 = scmp.le.s32.totalorder 1, %s18
    %p463 = scmp.lt.s32.totalorder %s18, 9
    %p464 = pnand %p462, %p463
    %p465 = pneg %p464
    // Predicated region
    $region65: #{clibert_forward.7} parent=5 // pred_check
      _
    $region66: #{clibert_forward.7} parent=5 // pred_check_branch
      %467 = sbr.rel (%p464) target = $region68
    $region67: #{clibert_forward.7} parent=5 // pred_region
      %s468 = ssub.s32 %s18, 1
      %s469 = smul.u32 2, %s29
      %p470 = scmp.lt.s32.totalorder %s28, 1
      %s471 = scalar_select %p470, %s28, 1
      %p472 = scmp.lt.s32.totalorder %s469, 1
      %s473 = scalar_select %p472, %s469, 1
      %s474 = smul.addr %s471, 2
      %s475 = sadd.s32 %s473, %s474
      %s476 = smul.addr %s475, 8
      %s477 = scalar_lea.vmem %s0, %s476
      %p478 = pneg %p65
      %p479 = pneg %p62
      %p480 = scmp.lt.s32.totalorder %s28, 1
      %s481 = scalar_select %p480, %s28, 1
      %s482 = smul.addr %s481, 2
      %s483 = smul.addr %s482, 8
      %s484 = scalar_lea.vmem %s1, %s483
      %p485 = pneg %p91
      %p486 = pneg %p88
      %p487 = scmp.lt.s32.totalorder %s30, 3
      %s488 = scalar_select %p487, %s30, 3
      %s489 = smul.addr %s488, 4
      %s490 = smul.addr %s489, 8
      %s491 = scalar_lea.vmem %s2, %s490
      %p492 = pneg %p117
      %p493 = pneg %p114
      %p494 = scmp.lt.s32.totalorder %s30, 3
      %s495 = scalar_select %p494, %s30, 3
      %s496 = scalar_lea.vmem %s3, %s495
      %p497 = pneg %p143
      %p498 = pneg %p140
      %p499 = scmp.lt.s32.totalorder %s30, 3
      %s500 = scalar_select %p499, %s30, 3
      %s501 = smul.addr %s500, 4
      %s502 = smul.addr %s501, 8
      %s503 = scalar_lea.vmem %s4, %s502
      %p504 = pneg %p169
      %p505 = pneg %p166
      %p506 = scmp.lt.s32.totalorder %s30, 3
      %s507 = scalar_select %p506, %s30, 3
      %s508 = scalar_lea.vmem %s5, %s507
      %p509 = pneg %p195
      %p510 = pneg %p192
      %p511 = scmp.lt.s32.totalorder %s30, 3
      %s512 = scalar_select %p511, %s30, 3
      %s513 = smul.addr %s512, 4
      %s514 = smul.addr %s513, 8
      %s515 = scalar_lea.vmem %s6, %s514
      %p516 = pneg %p221
      %p517 = pneg %p218
      %p518 = scmp.lt.s32.totalorder %s30, 3
      %s519 = scalar_select %p518, %s30, 3
      %s520 = scalar_lea.vmem %s7, %s519
      %p521 = pneg %p247
      %p522 = pneg %p244
      %p523 = scmp.lt.s32.totalorder %s30, 3
      %s524 = scalar_select %p523, %s30, 3
      %s525 = smul.addr %s524, 8
      %s526 = scalar_lea.vmem %s8, %s525
      %p527 = pneg %p273
      %p528 = pneg %p270
      %p529 = pneg %p294
      %p530 = pneg %p291
      %p531 = pneg %p315
      %p532 = pneg %p312
      %p533 = pneg %p336
      %p534 = pneg %p333
      %p535 = pneg %p364
      %p536 = pneg %p361
      %s537 = smul.u32 2, %s29
      %p538 = scmp.lt.s32.totalorder %s28, 1
      %s539 = scalar_select %p538, %s28, 1
      %p540 = scmp.lt.s32.totalorder %s537, 1
      %s541 = scalar_select %p540, %s537, 1
      %s542 = smul.addr %s539, 2
      %s543 = sadd.s32 %s541, %s542
      %s544 = smul.addr %s543, 8
      %s545 = scalar_lea.vmem %s12, %s544
      %s546 = smul.u32 2, %s29
      %p547 = scmp.lt.s32.totalorder %s28, 1
      %s548 = scalar_select %p547, %s28, 1
      %p549 = scmp.lt.s32.totalorder %s546, 1
      %s550 = scalar_select %p549, %s546, 1
      %s551 = smul.addr %s548, 2
      %s552 = sadd.s32 %s550, %s551
      %s553 = smul.addr %s552, 8
      %s554 = scalar_lea.vmem %s0, %s553
      %s555 = smul.u32 2, %s29
      %p556 = scmp.lt.s32.totalorder %s28, 1
      %s557 = scalar_select %p556, %s28, 1
      %s558 = smul.addr %s557, 2
      %s559 = smul.addr %s558, 8
      %s560 = scalar_lea.vmem %s1, %s559
      %p561 = scmp.lt.s32.totalorder %s30, 3
      %s562 = scalar_select %p561, %s30, 3
      %s563 = smul.addr %s562, 4
      %s564 = smul.addr %s563, 8
      %s565 = scalar_lea.vmem %s2, %s564
      %p566 = scmp.lt.s32.totalorder %s30, 3
      %s567 = scalar_select %p566, %s30, 3
      %s568 = scalar_lea.vmem %s3, %s567
      %p569 = scmp.lt.s32.totalorder %s30, 3
      %s570 = scalar_select %p569, %s30, 3
      %s571 = smul.addr %s570, 4
      %s572 = smul.addr %s571, 8
      %s573 = scalar_lea.vmem %s4, %s572
      %p574 = scmp.lt.s32.totalorder %s30, 3
      %s575 = scalar_select %p574, %s30, 3
      %s576 = scalar_lea.vmem %s5, %s575
      %p577 = scmp.lt.s32.totalorder %s30, 3
      %s578 = scalar_select %p577, %s30, 3
      %s579 = smul.addr %s578, 4
      %s580 = smul.addr %s579, 8
      %s581 = scalar_lea.vmem %s6, %s580
      %p582 = scmp.lt.s32.totalorder %s30, 3
      %s583 = scalar_select %p582, %s30, 3
      %s584 = scalar_lea.vmem %s7, %s583
      %p585 = scmp.lt.s32.totalorder %s30, 3
      %s586 = scalar_select %p585, %s30, 3
      %s587 = smul.addr %s586, 8
      %s588 = scalar_lea.vmem %s8, %s587
      %s589 = smul.u32 2, %s29
      %p590 = scmp.lt.s32.totalorder %s28, 1
      %s591 = scalar_select %p590, %s28, 1
      %p592 = scmp.lt.s32.totalorder %s589, 1
      %s593 = scalar_select %p592, %s589, 1
      %s594 = smul.addr %s591, 2
      %s595 = sadd.s32 %s593, %s594
      %s596 = smul.addr %s595, 8
      %s597 = scalar_lea.vmem %s12, %s596
      %s598 = smul.u32 2, %s29
      %p599 = scmp.eq.s32.totalorder %s30, 0
      // Predicated region
      $region69: #{clibert_forward.7} parent=67 // pred_check
        %p600 = pneg %p599
      $region70: #{clibert_forward.7} parent=67 // pred_check_branch
        %602 = sbr.rel (%p600) target = $region72
      $region71: #{clibert_forward.7} parent=67 // pred_region
        %vm603 = vcmask 261120
        %604 = vst.msk [vmem:[#allocation2] sm:$0xff] %vm603, 0.0
        %vm605 = vcmask 257024
        %606 = vst.msk [vmem:[#allocation2 + $0x8] sm:$0xf] %vm605, 0.0
      $region72: #{clibert_forward.7} parent=67 // pred_fallthru
        _
      %v607 = vld [vmem:[%s554] sm:$0xff]
      %v608 = vld [vmem:[%s554 + $0x8] sm:$0xf]
      %v609 = vld [vmem:[%s560] sm:$0xff]
      %v610 = vld [vmem:[%s560 + $0x8] sm:$0xf]
      %v611 = vld [vmem:[%s565] sm:$0xff]
      %v612 = vld [vmem:[%s565 + $0x8] sm:$0xff]
      %v613 = vld [vmem:[%s565 + $0x10] sm:$0xff]
      %v614 = vld [vmem:[%s565 + $0x18] sm:$0xff]
      %v615 = vld [vmem:[%s568] sm:$0x1]
      %v617 = vperm.slane %v615, 0
      %vm619 = vcmask 261120
      %v621 = vsel %vm619, %v607, 0
      %v624 = vsel %vm619, %v608, 0
      %626 = vmatpush.msra.mxu0 0.0
      %627 = vmatpush.msra.mxu0 0.0
      %628 = vmatpush.msra.mxu0 0.0
      %629 = vmatpush.msra.mxu0 0.0
      %630 = vmatpush.msra.mxu0 0.0
      %631 = vmatpush.msra.mxu0 0.0
      %632 = vmatpush.msra.mxu0 0.0
      %633 = vmatpush.msra.mxu0 0.0
      %634 = vmatpush.msra.mxu0 0.0
      %635 = vmatpush.msra.mxu0 0.0
      %636 = vmatpush.msra.mxu0 0.0
      %637 = vmatpush.msra.mxu0 0.0
      %638 = vmatpush.msra.mxu0 %v614
      %639 = vmatpush.msra.mxu0 %v613
      %640 = vmatpush.msra.mxu0 %v612
      %641 = vmatpush.msra.mxu0 %v611
      %642 = vmatmul.f32.gmra.mxu0 %v621
      %v643 = vpop.f32.mrf.mxu0
      %v644 = vadd.f32 %v617, %v643
      %645 = vmatmul.f32.gmra.mxu0 %v624
      %v646 = vpop.f32.mrf.mxu0
      %v647 = vadd.f32 %v617, %v646
      %648 = vdwg.mxu0
      %v649 = vld [vmem:[%s573] sm:$0xff]
      %v650 = vld [vmem:[%s573 + $0x8] sm:$0xff]
      %v651 = vld [vmem:[%s573 + $0x10] sm:$0xff]
      %v652 = vld [vmem:[%s573 + $0x18] sm:$0xff]
      %v653 = vld [vmem:[%s576] sm:$0x1]
      %v655 = vperm.slane %v653, 0
      %v658 = vsel %vm619, %v609, 0
      %v661 = vsel %vm619, %v610, 0
      %663 = vmatpush.msra.mxu0 0.0
      %664 = vmatpush.msra.mxu0 0.0
      %665 = vmatpush.msra.mxu0 0.0
      %666 = vmatpush.msra.mxu0 0.0
      %667 = vmatpush.msra.mxu0 0.0
      %668 = vmatpush.msra.mxu0 0.0
      %669 = vmatpush.msra.mxu0 0.0
      %670 = vmatpush.msra.mxu0 0.0
      %671 = vmatpush.msra.mxu0 0.0
      %672 = vmatpush.msra.mxu0 0.0
      %673 = vmatpush.msra.mxu0 0.0
      %674 = vmatpush.msra.mxu0 0.0
      %675 = vmatpush.msra.mxu0 %v652
      %676 = vmatpush.msra.mxu0 %v651
      %677 = vmatpush.msra.mxu0 %v650
      %678 = vmatpush.msra.mxu0 %v649
      %679 = vmatmul.f32.gmra.mxu0 %v658
      %v680 = vpop.f32.mrf.mxu0
      %v681 = vadd.f32 %v655, %v680
      %682 = vmatmul.f32.gmra.mxu0 %v661
      %v683 = vpop.f32.mrf.mxu0
      %v684 = vadd.f32 %v655, %v683
      %685 = vdwg.mxu0
      %v686 = vld [vmem:[%s581] sm:$0xff]
      %v687 = vld [vmem:[%s581 + $0x8] sm:$0xff]
      %v688 = vld [vmem:[%s581 + $0x10] sm:$0xff]
      %v689 = vld [vmem:[%s581 + $0x18] sm:$0xff]
      %v690 = vld [vmem:[%s584] sm:$0x1]
      %v692 = vperm.slane %v690, 0
      %694 = vmatpush.msra.mxu0 0.0
      %695 = vmatpush.msra.mxu0 0.0
      %696 = vmatpush.msra.mxu0 0.0
      %697 = vmatpush.msra.mxu0 0.0
      %698 = vmatpush.msra.mxu0 0.0
      %699 = vmatpush.msra.mxu0 0.0
      %700 = vmatpush.msra.mxu0 0.0
      %701 = vmatpush.msra.mxu0 0.0
      %702 = vmatpush.msra.mxu0 0.0
      %703 = vmatpush.msra.mxu0 0.0
      %704 = vmatpush.msra.mxu0 0.0
      %705 = vmatpush.msra.mxu0 0.0
      %706 = vmatpush.msra.mxu0 %v689
      %707 = vmatpush.msra.mxu0 %v688
      %708 = vmatpush.msra.mxu0 %v687
      %709 = vmatpush.msra.mxu0 %v686
      %710 = vmatmul.f32.gmra.mxu0 %v658
      %v711 = vpop.f32.mrf.mxu0
      %v712 = vadd.f32 %v692, %v711
      %713 = vmatmul.f32.gmra.mxu0 %v661
      %v714 = vpop.f32.mrf.mxu0
      %v715 = vadd.f32 %v692, %v714
      %716 = vdwg.mxu0
      %vm717 = vcmask 64512
      %v719 = vsel %vm717, %v644, 0
      %v722 = vsel %vm717, %v647, 0
      %v725 = vsel %vm717, %v681, 0
      %v728 = vsel %vm717, %v684, 0
      %730 = vmatpush.xpose.msra.mxu0 0.0
      %731 = vmatpush.xpose.msra.mxu0 0.0
      %732 = vmatpush.xpose.msra.mxu0 0.0
      %733 = vmatpush.xpose.msra.mxu0 0.0
      %734 = vmatpush.xpose.msra.mxu0 0.0
      %735 = vmatpush.xpose.msra.mxu0 0.0
      %736 = vmatpush.xpose.msra.mxu0 0.0
      %737 = vmatpush.xpose.msra.mxu0 0.0
      %738 = vmatpush.xpose.msra.mxu0 0.0
      %739 = vmatpush.xpose.msra.mxu0 0.0
      %740 = vmatpush.xpose.msra.mxu0 0.0
      %741 = vmatpush.xpose.msra.mxu0 0.0
      %742 = vmatpush.xpose.msra.mxu0 0.0
      %743 = vmatpush.xpose.msra.mxu0 0.0
      %744 = vmatpush.xpose.msra.mxu0 %v728
      %745 = vmatpush.xpose.msra.mxu0 %v725
      %746 = vmatmul.f32.gmra.mxu0 %v719
      %v747 = vpop.f32.mrf.mxu0
      %v748 = vadd.f32 0.0, %v747
      %749 = vmatmul.f32.gmra.mxu0 %v722
      %v750 = vpop.f32.mrf.mxu0
      %v751 = vadd.f32 0.0, %v750
      %752 = vdwg.mxu0
      %v753 = vmul.f32 %v748, 0.35355338
      %v754 = vmul.f32 %v751, 0.35355338
      %vm755 = vcmask 97280
      %v756 = vsel %vm755, %v753, -inf
      %757 = vmax.xlane.f32.xlu0 %v756
      %v758 = vpop.xlane.xlu0 %757
      %vm759 = vcmask 93184
      %v760 = vsel %vm759, %v754, -inf
      %761 = vmax.xlane.f32.xlu0 %v760
      %v762 = vpop.xlane.xlu0 %761
      %v763 = vsub.f32 %v753, %v758
      %v764 = vsub.f32 %v754, %v762
      %v765 = vmul.f32 %v763, 1.442695
      %v766 = vpow.pop %v765
      %v767 = vmul.f32 %v764, 1.442695
      %v768 = vpow.pop %v767
      %v769 = vsel %vm755, %v766, 0.0
      %770 = vadd.xlane.f32.xlu0 %v769
      %v771 = vpop.xlane.xlu0 %770
      %v772 = vsel %vm759, %v768, 0.0
      %773 = vadd.xlane.f32.xlu0 %v772
      %v774 = vpop.xlane.xlu0 %773
      %v775 = vrcp.pop %v771
      %v776 = vmul.f32 %v771, %v775
      %v777 = vsub.f32 1.0, %v776
      %v778 = vmul.f32 %v775, %v777
      %v779 = vadd.f32 %v775, %v778
      %vm780 = vweird.f32 %v771
      %vm781 = vweird.f32 %v775
      %vm782 = vmor %vm780, %vm781
      %v783 = vsel %vm782, %v775, %v779
      %v784 = vand.u32 2147483647, %v771
      %vm785 = vcmp.eq.f32.partialorder %v784, 8.507059e+37
      %v786 = vand.u32 %v771, 2147483648
      %v787 = vor.u32 1.1754944e-38, %v786
      %v788 = vsel %vm785, %v787, %v783
      %v789 = vmul.f32 %v766, %v788
      %v790 = vrcp.pop %v774
      %v791 = vmul.f32 %v774, %v790
      %v792 = vsub.f32 1.0, %v791
      %v793 = vmul.f32 %v790, %v792
      %v794 = vadd.f32 %v790, %v793
      %vm795 = vweird.f32 %v774
      %vm796 = vweird.f32 %v790
      %vm797 = vmor %vm795, %vm796
      %v798 = vsel %vm797, %v790, %v794
      %v799 = vand.u32 2147483647, %v774
      %vm800 = vcmp.eq.f32.partialorder %v799, 8.507059e+37
      %v801 = vand.u32 %v774, 2147483648
      %v802 = vor.u32 1.1754944e-38, %v801
      %v803 = vsel %vm800, %v802, %v798
      %v804 = vmul.f32 %v768, %v803
      %v806 = vsel %vm755, %v789, 0
      %v809 = vsel %vm755, %v804, 0
      %vm811 = vcmask 1043456
      %v813 = vsel %vm811, %v715, 0
      %815 = vmatpush.msra.mxu0 0.0
      %816 = vmatpush.msra.mxu0 0.0
      %817 = vmatpush.msra.mxu0 0.0
      %818 = vmatpush.msra.mxu0 0.0
      %819 = vmatpush.msra.mxu0 0.0
      %820 = vmatpush.msra.mxu0 0.0
      %821 = vmatpush.msra.mxu0 0.0
      %822 = vmatpush.msra.mxu0 0.0
      %823 = vmatpush.msra.mxu0 0.0
      %824 = vmatpush.msra.mxu0 0.0
      %825 = vmatpush.msra.mxu0 0.0
      %826 = vmatpush.msra.mxu0 0.0
      %827 = vmatpush.msra.mxu0 0.0
      %828 = vmatpush.msra.mxu0 0.0
      %829 = vmatpush.msra.mxu0 %v813
      %830 = vmatpush.msra.mxu0 %v712
      %831 = vmatmul.f32.gmra.mxu0 %v806
      %v832 = vpop.f32.mrf.mxu0
      %v833 = vadd.f32 0.0, %v832
      %834 = vmatmul.f32.gmra.mxu0 %v809
      %v835 = vpop.f32.mrf.mxu0
      %v836 = vadd.f32 0.0, %v835
      %837 = vdwg.mxu0
      %v838 = vld [vmem:[#allocation2] sm:$0xff]
      %v839 = vld [vmem:[#allocation2 + $0x8] sm:$0xf]
      %v840 = vld [vmem:[%s588] sm:$0xff]
      %v842 = vsel %vm717, %v833, 0
      %v845 = vsel %vm717, %v836, 0
      %847 = vmatpush.msra.mxu0 0.0
      %848 = vmatpush.msra.mxu0 0.0
      %849 = vmatpush.msra.mxu0 0.0
      %850 = vmatpush.msra.mxu0 0.0
      %851 = vmatpush.msra.mxu0 0.0
      %852 = vmatpush.msra.mxu0 0.0
      %853 = vmatpush.msra.mxu0 0.0
      %854 = vmatpush.msra.mxu0 0.0
      %855 = vmatpush.msra.mxu0 0.0
      %856 = vmatpush.msra.mxu0 0.0
      %857 = vmatpush.msra.mxu0 0.0
      %858 = vmatpush.msra.mxu0 0.0
      %859 = vmatpush.msra.mxu0 0.0
      %860 = vmatpush.msra.mxu0 0.0
      %861 = vmatpush.msra.mxu0 0.0
      %862 = vmatpush.msra.mxu0 %v840
      %863 = vmatmul.f32.gmra.mxu0 %v842
      %v864 = vpop.f32.mrf.mxu0
      %v865 = vadd.f32 0.0, %v864
      %866 = vmatmul.f32.gmra.mxu0 %v845
      %v867 = vpop.f32.mrf.mxu0
      %v868 = vadd.f32 0.0, %v867
      %869 = vdwg.mxu0
      %v870 = vadd.f32 %v838, %v865
      %v871 = vadd.f32 %v839, %v868
      %872 = vst.msk [vmem:[#allocation2] sm:$0xff] %vm619, %v870
      %vm873 = vcmask 257024
      %874 = vst.msk [vmem:[#allocation2 + $0x8] sm:$0xf] %vm873, %v871
      %p875 = scmp.eq.s32.totalorder %s30, 3
      // Predicated region
      $region73: #{clibert_forward.7} parent=67 // pred_check
        %p876 = pneg %p875
      $region74: #{clibert_forward.7} parent=67 // pred_check_branch
        %878 = sbr.rel (%p876) target = $region76
      $region75: #{clibert_forward.7} parent=67 // pred_region
        %v879 = vld [vmem:[#allocation2] sm:$0xff]
        %v880 = vld [vmem:[#allocation2 + $0x8] sm:$0xf]
        %v881 = vld [vmem:[%s9] sm:$0x1]
        %v883 = vperm.slane %v881, 0
        %v885 = vadd.f32 %v879, %v883
        %v886 = vadd.f32 %v880, %v883
        %v887 = vadd.f32 %v885, %v607
        %v888 = vadd.f32 %v886, %v608
        %v889 = vld [vmem:[%s10] sm:$0x1]
        %v890 = vld [vmem:[%s11] sm:$0x1]
        %v891 = vsel %vm619, %v887, 0.0
        %892 = vadd.xlane.f32.xlu0 %v891
        %v893 = vpop.xlane.xlu0 %892
        %v894 = vsel %vm873, %v888, 0.0
        %895 = vadd.xlane.f32.xlu0 %v894
        %v896 = vpop.xlane.xlu0 %895
        %v897 = vrcp.pop 32.0
        %v898 = vmul.f32 32.0, %v897
        %v899 = vsub.f32 1.0, %v898
        %v900 = vmul.f32 %v897, %v899
        %v901 = vadd.f32 %v897, %v900
        %vm902 = vweird.f32 %v897
        %v903 = vsel %vm902, %v897, %v901
        %v904 = vmul.f32 %v893, %v903
        %v905 = vmul.f32 %v896, %v903
        %v906 = vsub.f32 %v887, %v904
        %v907 = vsub.f32 %v888, %v905
        %v908 = vmul.f32 %v906, %v906
        %v909 = vmul.f32 %v907, %v907
        %v910 = vsel %vm619, %v908, 0.0
        %911 = vadd.xlane.f32.xlu0 %v910
        %v912 = vpop.xlane.xlu0 %911
        %v913 = vsel %vm873, %v909, 0.0
        %914 = vadd.xlane.f32.xlu0 %v913
        %v915 = vpop.xlane.xlu0 %914
        %v916 = vmul.f32 %v912, %v903
        %v917 = vmul.f32 %v915, %v903
        %v918 = vadd.f32 %v916, 1e-05
        %v919 = vadd.f32 %v917, 1e-05
        %v920 = vrsqrt.pop %v918
        %v921 = vmul.f32 %v920, %v918
        %v922 = vmul.f32 %v921, %v920
        %v923 = vmul.f32 0.5, %v922
        %v924 = vsub.f32 1.5, %v923
        %v925 = vmul.f32 %v920, %v924
        %vm926 = vweird.f32 %v918
        %vm927 = vweird.f32 %v920
        %vm928 = vmor %vm926, %vm927
        %v929 = vsel %vm928, %v920, %v925
        %v930 = vrsqrt.pop %v919
        %v931 = vmul.f32 %v930, %v919
        %v932 = vmul.f32 %v931, %v930
        %v933 = vmul.f32 0.5, %v932
        %v934 = vsub.f32 1.5, %v933
        %v935 = vmul.f32 %v930, %v934
        %vm936 = vweird.f32 %v919
        %vm937 = vweird.f32 %v930
        %vm938 = vmor %vm936, %vm937
        %v939 = vsel %vm938, %v930, %v935
        %v940 = vmul.f32 %v906, %v929
        %v941 = vmul.f32 %v907, %v939
        %v943 = vperm.slane %v889, 0
        %v945 = vmul.f32 %v940, %v943
        %v946 = vmul.f32 %v941, %v943
        %v948 = vperm.slane %v890, 0
        %v950 = vadd.f32 %v945, %v948
        %v951 = vadd.f32 %v946, %v948
        %952 = vst.msk [vmem:[%s597] sm:$0xff] %vm619, %v950
        %953 = vst.msk [vmem:[%s597 + $0x8] sm:$0xf] %vm873, %v951
      $region76: #{clibert_forward.7} parent=67 // pred_fallthru
        _
      %s954 = smul.u32 2, %s29
      %p955 = scmp.lt.s32.totalorder %s28, 1
      %s956 = scalar_select %p955, %s28, 1
      %p957 = scmp.lt.s32.totalorder %s954, 1
      %s958 = scalar_select %p957, %s954, 1
      %s959 = smul.addr %s956, 2
      %s960 = sadd.s32 %s958, %s959
      %s961 = smul.addr %s960, 8
      %s962 = scalar_lea.vmem %s12, %s961
      // Predicated region
      $region77: #{clibert_forward.7} parent=67 // pred_check
        %p963 = pneg %p361
      $region78: #{clibert_forward.7} parent=67 // pred_check_branch
        %965 = sbr.rel (%p963) target = $region80
      $region79: #{clibert_forward.7} parent=67 // pred_region
        %s966 = smul.u32 2, %s29
      $region80: #{clibert_forward.7} parent=67 // pred_fallthru
        _
    $region68: #{clibert_forward.7} parent=5 // pred_fallthru
      _
    %p967 = scmp.le.s32.totalorder 2, %s18
    // Predicated region
    $region81: #{clibert_forward.7} parent=5 // pred_check
      %p968 = pneg %p967
    $region82: #{clibert_forward.7} parent=5 // pred_check_branch
      %970 = sbr.rel (%p968) target = $region84
    $region83: #{clibert_forward.7} parent=5 // pred_region
      %s971 = ssub.s32 %s18, 2
      // Predicated region
      $region85: #{clibert_forward.7} parent=83 // pred_check
        %p972 = pneg %p367
      $region86: #{clibert_forward.7} parent=83 // pred_check_branch
        %974 = sbr.rel (%p972) target = $region88
      $region87: #{clibert_forward.7} parent=83 // pred_region
        %s975 = smul.u32 2, %s32
        %p976 = scmp.lt.s32.totalorder %s31, 1
        %s977 = scalar_select %p976, %s31, 1
        %p978 = scmp.lt.s32.totalorder %s975, 1
        %s979 = scalar_select %p978, %s975, 1
        %s980 = smul.addr %s977, 2
        %s981 = sadd.s32 %s979, %s980
        %s982 = smul.addr %s981, 8
        %s983 = scalar_lea.vmem %s12, %s982
      $region88: #{clibert_forward.7} parent=83 // pred_fallthru
        _
    $region84: #{clibert_forward.7} parent=5 // pred_fallthru
      _
  $region6: #{clibert_forward.7} parent=0 // loop_footer
    %s22 = sadd.s32 1, %s18
  $region7: #{clibert_forward.7} parent=0 // loop_footer_branch
    %17 = sbr.rel target = $region3
  $region8: #{clibert_forward.7} parent=0 // loop_exit
    _

// kernel: clibert_forward.11
$region0: #{clibert_forward.11}
  #allocation0 [shape = 'u32[]', space=smem, size = 0x4, offset = 0x4, fixed_abs, tag = 'smem constant byte address 0x4 - core index']
  #allocation1 [shape = 'u32[72,128]{1,0:T(1,128)}', space=vmem, size = 0x9000, scoped, tag = 'internal scratch']
  %s0 = inlined_call_operand.vmem [shape: f32[24,32], index: 0, kind: input, shape index: {}]
  %s1 = inlined_call_operand.vmem [shape: f32[32,128], index: 1, kind: input, shape index: {}]
  %s2 = inlined_call_operand.vmem [shape: f32[1,128], index: 2, kind: input, shape index: {}]
  %s3 = inlined_call_operand.vmem [shape: f32[1,128], index: 3, kind: input, shape index: {}]
  %s4 = inlined_call_operand.vmem [shape: f32[1,128], index: 4, kind: input, shape index: {}]
  %s5 = inlined_call_operand.vmem [shape: f32[128,128], index: 5, kind: input, shape index: {}]
  %s6 = inlined_call_operand.vmem [shape: f32[1,128], index: 6, kind: input, shape index: {}]
  %s7 = inlined_call_operand.vmem [shape: f32[24,128], index: 7, kind: output, shape index: {}]
  %s8 = sld [smem:[#allocation0]]
  $region38: #{clibert_forward.11} parent=0
    _
  %s10 = ssub.s32 1, %s8
  %s11 = scalar_select 0, %s10, %s8
  // Predicated region
  $region2: #{clibert_forward.11} parent=0 // pred_check
    _
  $region3: #{clibert_forward.11} parent=0 // pred_check_branch
    %13 = sbr.rel (0) target = $region5
  $region4: #{clibert_forward.11} parent=0 // pred_region
    _
  $region5: #{clibert_forward.11} parent=0 // pred_fallthru
    _
  // Predicated region
  $region6: #{clibert_forward.11} parent=0 // pred_check
    _
  $region7: #{clibert_forward.11} parent=0 // pred_check_branch
    %15 = sbr.rel (0) target = $region9
  $region8: #{clibert_forward.11} parent=0 // pred_region
    _
  $region9: #{clibert_forward.11} parent=0 // pred_fallthru
    _
  // Predicated region
  $region10: #{clibert_forward.11} parent=0 // pred_check
    _
  $region11: #{clibert_forward.11} parent=0 // pred_check_branch
    %17 = sbr.rel (0) target = $region13
  $region12: #{clibert_forward.11} parent=0 // pred_region
    _
  $region13: #{clibert_forward.11} parent=0 // pred_fallthru
    _
  // Predicated region
  $region14: #{clibert_forward.11} parent=0 // pred_check
    _
  $region15: #{clibert_forward.11} parent=0 // pred_check_branch
    %19 = sbr.rel (0) target = $region17
  $region16: #{clibert_forward.11} parent=0 // pred_region
    _
  $region17: #{clibert_forward.11} parent=0 // pred_fallthru
    _
  // Predicated region
  $region18: #{clibert_forward.11} parent=0 // pred_check
    _
  $region19: #{clibert_forward.11} parent=0 // pred_check_branch
    %21 = sbr.rel (0) target = $region21
  $region20: #{clibert_forward.11} parent=0 // pred_region
    _
  $region21: #{clibert_forward.11} parent=0 // pred_fallthru
    _
  // Predicated region
  $region22: #{clibert_forward.11} parent=0 // pred_check
    _
  $region23: #{clibert_forward.11} parent=0 // pred_check_branch
    %23 = sbr.rel (0) target = $region25
  $region24: #{clibert_forward.11} parent=0 // pred_region
    _
  $region25: #{clibert_forward.11} parent=0 // pred_fallthru
    _
  // Predicated region
  $region26: #{clibert_forward.11} parent=0 // pred_check
    _
  $region27: #{clibert_forward.11} parent=0 // pred_check_branch
    %25 = sbr.rel (0) target = $region29
  $region28: #{clibert_forward.11} parent=0 // pred_region
    _
  $region29: #{clibert_forward.11} parent=0 // pred_fallthru
    _
  %v26 = vld [vmem:[%s0] sm:$0xff]
  %v27 = vld [vmem:[%s0 + $0x8] sm:$0xff]
  %v28 = vld [vmem:[%s0 + $0x10] sm:$0xff]
  %v29 = vld [vmem:[%s1] sm:$0xff]
  %v30 = vld [vmem:[%s1 + $0x8] sm:$0xff]
  %v31 = vld [vmem:[%s1 + $0x10] sm:$0xff]
  %v32 = vld [vmem:[%s1 + $0x18] sm:$0xff]
  %v33 = vld [vmem:[%s2] sm:$0x1]
  %v35 = vperm.slane %v33, 0
  %vm37 = vcmask 261120
  %v39 = vsel %vm37, %v26, 0
  %v42 = vsel %vm37, %v27, 0
  %v45 = vsel %vm37, %v28, 0
  %47 = vmatpush.msra.mxu0 0.0
  %48 = vmatpush.msra.mxu0 0.0
  %49 = vmatpush.msra.mxu0 0.0
  %50 = vmatpush.msra.mxu0 0.0
  %51 = vmatpush.msra.mxu0 0.0
  %52 = vmatpush.msra.mxu0 0.0
  %53 = vmatpush.msra.mxu0 0.0
  %54 = vmatpush.msra.mxu0 0.0
  %55 = vmatpush.msra.mxu0 0.0
  %56 = vmatpush.msra.mxu0 0.0
  %57 = vmatpush.msra.mxu0 0.0
  %58 = vmatpush.msra.mxu0 0.0
  %59 = vmatpush.msra.mxu0 %v32
  %60 = vmatpush.msra.mxu0 %v31
  %61 = vmatpush.msra.mxu0 %v30
  %62 = vmatpush.msra.mxu0 %v29
  %63 = vmatmul.f32.gmra.mxu0 %v39
  %v64 = vpop.f32.mrf.mxu0
  %v65 = vadd.f32 %v35, %v64
  %66 = vmatmul.f32.gmra.mxu0 %v42
  %v67 = vpop.f32.mrf.mxu0
  %v68 = vadd.f32 %v35, %v67
  %69 = vmatmul.f32.gmra.mxu0 %v45
  %v70 = vpop.f32.mrf.mxu0
  %v71 = vadd.f32 %v35, %v70
  %72 = vdwg.mxu0
  %v73 = vlaneseq
  %v74 = vand.u32 %v73, 127
  %vm75 = vcmp.lt.s32.totalorder %v74, 16
  %v76 = vsel %vm75, 1, 0
  %v77 = vcvt.s32.f32 %v76
  %v78 = vmul.f32 %v65, %v77
  %v79 = vmul.f32 %v68, %v77
  %v80 = vmul.f32 %v71, %v77
  %81 = vadd.xlane.f32.xlu0 %v78
  %v82 = vpop.xlane.xlu0 %81
  %83 = vadd.xlane.f32.xlu0 %v79
  %v84 = vpop.xlane.xlu0 %83
  %85 = vadd.xlane.f32.xlu0 %v80
  %v86 = vpop.xlane.xlu0 %85
  %v87 = vrcp.pop 16.0
  %v88 = vmul.f32 16.0, %v87
  %v89 = vsub.f32 1.0, %v88
  %v90 = vmul.f32 %v87, %v89
  %v91 = vadd.f32 %v87, %v90
  %vm92 = vweird.f32 %v87
  %v93 = vsel %vm92, %v87, %v91
  %v94 = vmul.f32 %v82, %v93
  %v95 = vmul.f32 %v84, %v93
  %v96 = vmul.f32 %v86, %v93
  %v97 = vsub.f32 %v78, %v94
  %v98 = vsub.f32 %v79, %v95
  %v99 = vsub.f32 %v80, %v96
  %v100 = vmul.f32 %v97, %v77
  %v101 = vmul.f32 %v98, %v77
  %v102 = vmul.f32 %v99, %v77
  %v103 = vmul.f32 %v100, %v100
  %v104 = vmul.f32 %v101, %v101
  %v105 = vmul.f32 %v102, %v102
  %106 = vadd.xlane.f32.xlu0 %v103
  %v107 = vpop.xlane.xlu0 %106
  %108 = vadd.xlane.f32.xlu0 %v104
  %v109 = vpop.xlane.xlu0 %108
  %110 = vadd.xlane.f32.xlu0 %v105
  %v111 = vpop.xlane.xlu0 %110
  %v112 = vmul.f32 %v107, %v93
  %v113 = vmul.f32 %v109, %v93
  %v114 = vmul.f32 %v111, %v93
  %v115 = vadd.f32 %v112, 1e-05
  %v116 = vadd.f32 %v113, 1e-05
  %v117 = vadd.f32 %v114, 1e-05
  %v118 = vrsqrt.pop %v115
  %v119 = vmul.f32 %v118, %v115
  %v120 = vmul.f32 %v119, %v118
  %v121 = vmul.f32 0.5, %v120
  %v122 = vsub.f32 1.5, %v121
  %v123 = vmul.f32 %v118, %v122
  %vm124 = vweird.f32 %v115
  %vm125 = vweird.f32 %v118
  %vm126 = vmor %vm124, %vm125
  %v127 = vsel %vm126, %v118, %v123
  %v128 = vrsqrt.pop %v116
  %v129 = vmul.f32 %v128, %v116
  %v130 = vmul.f32 %v129, %v128
  %v131 = vmul.f32 0.5, %v130
  %v132 = vsub.f32 1.5, %v131
  %v133 = vmul.f32 %v128, %v132
  %vm134 = vweird.f32 %v116
  %vm135 = vweird.f32 %v128
  %vm136 = vmor %vm134, %vm135
  %v137 = vsel %vm136, %v128, %v133
  %v138 = vrsqrt.pop %v117
  %v139 = vmul.f32 %v138, %v117
  %v140 = vmul.f32 %v139, %v138
  %v141 = vmul.f32 0.5, %v140
  %v142 = vsub.f32 1.5, %v141
  %v143 = vmul.f32 %v138, %v142
  %vm144 = vweird.f32 %v117
  %vm145 = vweird.f32 %v138
  %vm146 = vmor %vm144, %vm145
  %v147 = vsel %vm146, %v138, %v143
  %v148 = vmul.f32 %v100, %v127
  %v149 = vmul.f32 %v101, %v137
  %v150 = vmul.f32 %v102, %v147
  %v151 = vld [vmem:[%s3] sm:$0x1]
  %v153 = vperm.slane %v151, 0
  %v155 = vmul.f32 %v148, %v153
  %v156 = vmul.f32 %v149, %v153
  %v157 = vmul.f32 %v150, %v153
  %v158 = vld [vmem:[%s4] sm:$0x1]
  %v160 = vperm.slane %v158, 0
  %v162 = vadd.f32 %v155, %v160
  %v163 = vadd.f32 %v156, %v160
  %v164 = vadd.f32 %v157, %v160
  %v165 = vmax.f32 %v162, 0.0
  %v166 = vmax.f32 %v163, 0.0
  %v167 = vmax.f32 %v164, 0.0
  %v168 = vld [vmem:[%s5] sm:$0xff]
  %v169 = vld [vmem:[%s5 + $0x8] sm:$0xff]
  %v170 = vld [vmem:[%s5 + $0x10] sm:$0xff]
  %v171 = vld [vmem:[%s5 + $0x18] sm:$0xff]
  %v172 = vld [vmem:[%s5 + $0x20] sm:$0xff]
  %v173 = vld [vmem:[%s5 + $0x28] sm:$0xff]
  %v174 = vld [vmem:[%s5 + $0x30] sm:$0xff]
  %v175 = vld [vmem:[%s5 + $0x38] sm:$0xff]
  %v176 = vld [vmem:[%s5 + $0x40] sm:$0xff]
  %v177 = vld [vmem:[%s5 + $0x48] sm:$0xff]
  %v178 = vld [vmem:[%s5 + $0x50] sm:$0xff]
  %v179 = vld [vmem:[%s5 + $0x58] sm:$0xff]
  %v180 = vld [vmem:[%s5 + $0x60] sm:$0xff]
  %v181 = vld [vmem:[%s5 + $0x68] sm:$0xff]
  %v182 = vld [vmem:[%s5 + $0x70] sm:$0xff]
  %v183 = vld [vmem:[%s5 + $0x78] sm:$0xff]
  %v184 = vld [vmem:[%s6] sm:$0x1]
  %v186 = vperm.slane %v184, 0
  %188 = vmatpush.msra.mxu0 %v183
  %189 = vmatpush.msra.mxu0 %v182
  %190 = vmatpush.msra.mxu0 %v181
  %191 = vmatpush.msra.mxu0 %v180
  %192 = vmatpush.msra.mxu0 %v179
  %193 = vmatpush.msra.mxu0 %v178
  %194 = vmatpush.msra.mxu0 %v177
  %195 = vmatpush.msra.mxu0 %v176
  %196 = vmatpush.msra.mxu0 %v175
  %197 = vmatpush.msra.mxu0 %v174
  %198 = vmatpush.msra.mxu0 %v173
  %199 = vmatpush.msra.mxu0 %v172
  %200 = vmatpush.msra.mxu0 %v171
  %201 = vmatpush.msra.mxu0 %v170
  %202 = vmatpush.msra.mxu0 %v169
  %203 = vmatpush.msra.mxu0 %v168
  %204 = vmatmul.f32.gmra.mxu0 %v165
  %v205 = vpop.f32.mrf.mxu0
  %v206 = vadd.f32 %v186, %v205
  %207 = vmatmul.f32.gmra.mxu0 %v166
  %v208 = vpop.f32.mrf.mxu0
  %v209 = vadd.f32 %v186, %v208
  %210 = vmatmul.f32.gmra.mxu0 %v167
  %v211 = vpop.f32.mrf.mxu0
  %v212 = vadd.f32 %v186, %v211
  %213 = vdwg.mxu0
  %214 = vst [vmem:[%s7] sm:$0xff] %v206
  %215 = vst [vmem:[%s7 + $0x8] sm:$0xff] %v209
  %216 = vst [vmem:[%s7 + $0x10] sm:$0xff] %v212
  // Predicated region
  $region30: #{clibert_forward.11} parent=0 // pred_check
    _
  $region31: #{clibert_forward.11} parent=0 // pred_check_branch
    %218 = sbr.rel (0) target = $region33
  $region32: #{clibert_forward.11} parent=0 // pred_region
    _
  $region33: #{clibert_forward.11} parent=0 // pred_fallthru
    _
  // Predicated region
  $region34: #{clibert_forward.11} parent=0 // pred_check
    _
  $region35: #{clibert_forward.11} parent=0 // pred_check_branch
    %220 = sbr.rel (0) target = $region37
  $region36: #{clibert_forward.11} parent=0 // pred_region
    _
  $region37: #{clibert_forward.11} parent=0 // pred_fallthru
    _

</llo_original>
